<compile_context>
chip_gen: v5e
topology: v5e:2x2
jax: 0.10.0
libtpu: 0.0.40
codegen_flags: <defaults>
</compile_context>

<pallas_src>
import functools

import jax
import jax.numpy as jnp
from jax import lax
from jax.experimental import pallas as pl
from jax.experimental.pallas import tpu as pltpu

# ---- module hyper-parameters (from demoFunc.py) ----
NUM_LAYERS = 5
NUM_NEURONS = 64
LAYERS = NUM_LAYERS * [NUM_NEURONS]
SEQ_LEN = 1

SUB_ROWS = 256        # rows per register-resident sub-block (2x(256,64) f32 = 32 vregs)
MAX_TILE_ROWS = 1024  # max rows per grid step (amortizes per-step pipeline overhead)
LANE = 128            # TPU lane width


def mlp_kernel(x_ref,
               w0_ref, b0_ref, w1_ref, b1_ref, w2_ref, b2_ref,
               w3_ref, b3_ref, w4_ref, b4_ref, w5_ref, b5_ref,
               out_ref, *, sub_rows, n_sub):
    """6-layer tanh MLP over a (tm, Din) row tile, processed in `sub_rows` chunks.

    Dropout(p=0.2) layers are identity at inference time.
    # TODO(synk): training-mode dropout (stochastic masking) not implemented.
    """

    def sub_block(s, carry):
        r0 = pl.multiple_of(s * sub_rows, sub_rows)
        h = x_ref[pl.ds(r0, sub_rows), :]
        h = jnp.tanh(jnp.dot(h, w0_ref[...], preferred_element_type=jnp.float32)
                     + b0_ref[...])
        h = jnp.tanh(jnp.dot(h, w1_ref[...], preferred_element_type=jnp.float32)
                     + b1_ref[...])
        h = jnp.tanh(jnp.dot(h, w2_ref[...], preferred_element_type=jnp.float32)
                     + b2_ref[...])
        h = jnp.tanh(jnp.dot(h, w3_ref[...], preferred_element_type=jnp.float32)
                     + b3_ref[...])
        h = jnp.tanh(jnp.dot(h, w4_ref[...], preferred_element_type=jnp.float32)
                     + b4_ref[...])
        # Final layer weights are lane-padded to a multiple of 128 in the wrapper,
        # so this store is a full-lane, unmasked vst.
        out_ref[pl.ds(r0, sub_rows), :] = (
            jnp.dot(h, w5_ref[...], preferred_element_type=jnp.float32)
            + b5_ref[...])
        return carry

    # Short static trip count: unroll for LLO scheduler visibility.
    lax.fori_loop(0, n_sub, sub_block, 0, unroll=True)


def _choose_row_tiling(n_rows):
    """Return (n_pad, tm, sub): padded row count, grid-tile rows, sub-block rows."""
    if n_rows <= SUB_ROWS:
        sub = max(8, ((n_rows + 7) // 8) * 8)
        return sub, sub, sub
    n_pad = ((n_rows + SUB_ROWS - 1) // SUB_ROWS) * SUB_ROWS
    n_blocks = n_pad // SUB_ROWS
    # Up to MAX_TILE_ROWS per grid step, but keep >= 2 grid steps so the
    # "parallel" axis can still be split across v7x's 2 TensorCores.
    per_tile = min(MAX_TILE_ROWS // SUB_ROWS, max(1, n_blocks // 2))
    while n_blocks % per_tile:
        per_tile -= 1
    return n_pad, per_tile * SUB_ROWS, SUB_ROWS


def neural_net_forward(inputs, params):
    """inputs: (B, S, Din) float32. Returns (B*S/S, S, Dout) like the PyTorch view."""
    B, S, Din = inputs.shape
    Dout = params["weights"][-1].shape[1]
    N = B * S

    x2d = inputs.reshape(N, Din).astype(jnp.float32)
    n_pad, tm, sub = _choose_row_tiling(N)
    if n_pad != N:
        x2d = jnp.pad(x2d, ((0, n_pad - N), (0, 0)))

    # Lane-dense output width: pad the last layer to a multiple of 128 lanes
    # (one-time constant pad; padded columns are zeros and sliced away below).
    out_pad = ((Dout + LANE - 1) // LANE) * LANE

    # Kernel operands: weights stored as (in, out) so the kernel computes x @ W + b;
    # biases as (1, out).
    wb = []
    n_layers = len(params["weights"])
    for li, (w, b) in enumerate(zip(params["weights"], params["biases"])):
        if li == n_layers - 1 and out_pad != Dout:
            w = jnp.pad(w, ((0, 0), (0, out_pad - Dout)))
            b = jnp.pad(b, (0, out_pad - Dout))
        wb.append(w)
        wb.append(b.reshape(1, -1))

    # x tiled over rows; weights/biases use a constant index_map so the pipeline
    # DMAs them exactly once (no per-step re-fetch).
    in_specs = [pl.BlockSpec((tm, Din), lambda i: (i, 0))]
    for a in wb:
        in_specs.append(pl.BlockSpec(a.shape, lambda i: (0, 0)))

    kernel = functools.partial(mlp_kernel, sub_rows=sub, n_sub=tm // sub)

    out2d = pl.pallas_call(
        kernel,
        out_shape=jax.ShapeDtypeStruct((n_pad, out_pad), jnp.float32),
        grid_spec=pltpu.PrefetchScalarGridSpec(
            num_scalar_prefetch=0,
            grid=(n_pad // tm,),
            in_specs=in_specs,
            out_specs=pl.BlockSpec((tm, out_pad), lambda i: (i, 0)),
        ),
        compiler_params=pltpu.CompilerParams(
            dimension_semantics=("parallel",)),
    )(x2d, *wb)

    # Drop row padding and the lane padding, then .view((-1, seq_len, outputs_dim)).
    return out2d[:N, :Dout].reshape(-1, S, Dout)


def init_params(key, inputs_dim, outputs_dim, layers):
    """Xavier-normal weights (as in the module); PyTorch-default uniform biases."""
    dims = [inputs_dim] + list(layers) + [outputs_dim]
    weights, biases = [], []
    for i in range(len(dims) - 1):
        fan_in, fan_out = dims[i], dims[i + 1]
        key, kw, kb = jax.random.split(key, 3)
        std = (2.0 / (fan_in + fan_out)) ** 0.5
        w = std * jax.random.normal(kw, (fan_in, fan_out), dtype=jnp.float32)
        bound = 1.0 / (fan_in ** 0.5)
        b = jax.random.uniform(kb, (fan_out,), minval=-bound, maxval=bound,
                               dtype=jnp.float32)
        weights.append(w)
        biases.append(b)
    return {"weights": weights, "biases": biases}


def reference_forward(inputs, params):
    """Pure-JAX reference matching the PyTorch module (dropout = identity)."""
    B, S, Din = inputs.shape
    h = inputs.reshape(-1, Din)
    n = len(params["weights"])
    for i, (w, b) in enumerate(zip(params["weights"], params["biases"])):
        h = h @ w + b
        if i < n - 1:
            h = jnp.tanh(h)
    return h.reshape(-1, S, h.shape[-1])


if __name__ == "__main__":
    key = jax.random.PRNGKey(0)

    batch = 1024          # N = batch*seq = 1024 -> tm=512 (2 grid steps), 2 sub-blocks
    inputs_dim = 4
    outputs_dim = 2

    key, k_in, k_p = jax.random.split(key, 3)
    inputs = jax.random.normal(k_in, (batch, SEQ_LEN, inputs_dim), dtype=jnp.float32)
    params = init_params(k_p, inputs_dim, outputs_dim, LAYERS)

    fwd = jax.jit(functools.partial(neural_net_forward, params=params))
    out = fwd(inputs)
    jax.block_until_ready(out)

    ref = reference_forward(inputs, params)
    assert out.shape == (batch, SEQ_LEN, outputs_dim)
    assert jnp.allclose(out, ref, atol=1e-5, rtol=1e-5), "mismatch vs JAX reference"

    print("KERNEL_OK")
</pallas_src>

<mosaic_0001>
module attributes {stable_mosaic.version = 11 : i64} {
  func.func @mlp_kernel(%arg0: i32, %arg1: memref<512x4xf32, #tpu.memory_space<vmem>>, %arg2: memref<4x64xf32, #tpu.memory_space<vmem>>, %arg3: memref<1x64xf32, #tpu.memory_space<vmem>>, %arg4: memref<64x64xf32, #tpu.memory_space<vmem>>, %arg5: memref<1x64xf32, #tpu.memory_space<vmem>>, %arg6: memref<64x64xf32, #tpu.memory_space<vmem>>, %arg7: memref<1x64xf32, #tpu.memory_space<vmem>>, %arg8: memref<64x64xf32, #tpu.memory_space<vmem>>, %arg9: memref<1x64xf32, #tpu.memory_space<vmem>>, %arg10: memref<64x64xf32, #tpu.memory_space<vmem>>, %arg11: memref<1x64xf32, #tpu.memory_space<vmem>>, %arg12: memref<64x128xf32, #tpu.memory_space<vmem>>, %arg13: memref<1x128xf32, #tpu.memory_space<vmem>>, %arg14: memref<512x128xf32, #tpu.memory_space<vmem>>) attributes {dimension_semantics = [#tpu.dimension_semantics<parallel>], iteration_bounds = array<i64: 2>, scalar_prefetch = 0 : i64, scratch_operands = 0 : i64, tpu.core_type = #tpu.core_type<tc>, window_params = [{transform_indices = @transform_0, window_bounds = array<i64: 512, 4>}, {pipeline_mode = #tpu.pipeline_mode<synchronous>, transform_indices = @transform_1, window_bounds = array<i64: 4, 64>}, {pipeline_mode = #tpu.pipeline_mode<synchronous>, transform_indices = @transform_2, window_bounds = array<i64: 1, 64>}, {pipeline_mode = #tpu.pipeline_mode<synchronous>, transform_indices = @transform_3, window_bounds = array<i64: 64, 64>}, {pipeline_mode = #tpu.pipeline_mode<synchronous>, transform_indices = @transform_4, window_bounds = array<i64: 1, 64>}, {pipeline_mode = #tpu.pipeline_mode<synchronous>, transform_indices = @transform_5, window_bounds = array<i64: 64, 64>}, {pipeline_mode = #tpu.pipeline_mode<synchronous>, transform_indices = @transform_6, window_bounds = array<i64: 1, 64>}, {pipeline_mode = #tpu.pipeline_mode<synchronous>, transform_indices = @transform_7, window_bounds = array<i64: 64, 64>}, {pipeline_mode = #tpu.pipeline_mode<synchronous>, transform_indices = @transform_8, window_bounds = array<i64: 1, 64>}, {pipeline_mode = #tpu.pipeline_mode<synchronous>, transform_indices = @transform_9, window_bounds = array<i64: 64, 64>}, {pipeline_mode = #tpu.pipeline_mode<synchronous>, transform_indices = @transform_10, window_bounds = array<i64: 1, 64>}, {pipeline_mode = #tpu.pipeline_mode<synchronous>, transform_indices = @transform_11, window_bounds = array<i64: 64, 128>}, {pipeline_mode = #tpu.pipeline_mode<synchronous>, transform_indices = @transform_12, window_bounds = array<i64: 1, 128>}, {transform_indices = @transform_13, window_bounds = array<i64: 512, 128>}]} {
    %c0_i32 = arith.constant 0 : i32
    %c256_i32 = arith.constant 256 : i32
    %0 = arith.muli %c0_i32, %c256_i32 : i32
    %1 = tpu.assume_multiple %0, 256 : i32
    %2 = arith.index_cast %1 : i32 to index
    %c0 = arith.constant 0 : index
    %3 = vector.load %arg1[%2, %c0] : memref<512x4xf32, #tpu.memory_space<vmem>>, vector<256x4xf32>
    %c0_0 = arith.constant 0 : index
    %c0_1 = arith.constant 0 : index
    %4 = vector.load %arg2[%c0_0, %c0_1] : memref<4x64xf32, #tpu.memory_space<vmem>>, vector<4x64xf32>
    %cst = arith.constant dense<0.000000e+00> : vector<256x64xf32>
    %5 = tpu.matmul %3, %4, %cst {dimension_numbers = #tpu.dot_dimension_numbers<[1], [0], [0], [1], [0, 0, 1, 1], [], []>} : vector<256x4xf32>, vector<4x64xf32>, vector<256x64xf32> -> vector<256x64xf32>
    %c0_2 = arith.constant 0 : index
    %c0_3 = arith.constant 0 : index
    %6 = vector.load %arg3[%c0_2, %c0_3] : memref<1x64xf32, #tpu.memory_space<vmem>>, vector<1x64xf32>
    %7 = vector.broadcast %6 : vector<1x64xf32> to vector<256x64xf32>
    %8 = arith.addf %5, %7 : vector<256x64xf32>
    %9 = math.tanh %8 : vector<256x64xf32>
    %c0_4 = arith.constant 0 : index
    %c0_5 = arith.constant 0 : index
    %10 = vector.load %arg4[%c0_4, %c0_5] : memref<64x64xf32, #tpu.memory_space<vmem>>, vector<64x64xf32>
    %cst_6 = arith.constant dense<0.000000e+00> : vector<256x64xf32>
    %11 = tpu.matmul %9, %10, %cst_6 {dimension_numbers = #tpu.dot_dimension_numbers<[1], [0], [0], [1], [0, 0, 1, 1], [], []>} : vector<256x64xf32>, vector<64x64xf32>, vector<256x64xf32> -> vector<256x64xf32>
    %c0_7 = arith.constant 0 : index
    %c0_8 = arith.constant 0 : index
    %12 = vector.load %arg5[%c0_7, %c0_8] : memref<1x64xf32, #tpu.memory_space<vmem>>, vector<1x64xf32>
    %13 = vector.broadcast %12 : vector<1x64xf32> to vector<256x64xf32>
    %14 = arith.addf %11, %13 : vector<256x64xf32>
    %15 = math.tanh %14 : vector<256x64xf32>
    %c0_9 = arith.constant 0 : index
    %c0_10 = arith.constant 0 : index
    %16 = vector.load %arg6[%c0_9, %c0_10] : memref<64x64xf32, #tpu.memory_space<vmem>>, vector<64x64xf32>
    %cst_11 = arith.constant dense<0.000000e+00> : vector<256x64xf32>
    %17 = tpu.matmul %15, %16, %cst_11 {dimension_numbers = #tpu.dot_dimension_numbers<[1], [0], [0], [1], [0, 0, 1, 1], [], []>} : vector<256x64xf32>, vector<64x64xf32>, vector<256x64xf32> -> vector<256x64xf32>
    %c0_12 = arith.constant 0 : index
    %c0_13 = arith.constant 0 : index
    %18 = vector.load %arg7[%c0_12, %c0_13] : memref<1x64xf32, #tpu.memory_space<vmem>>, vector<1x64xf32>
    %19 = vector.broadcast %18 : vector<1x64xf32> to vector<256x64xf32>
    %20 = arith.addf %17, %19 : vector<256x64xf32>
    %21 = math.tanh %20 : vector<256x64xf32>
    %c0_14 = arith.constant 0 : index
    %c0_15 = arith.constant 0 : index
    %22 = vector.load %arg8[%c0_14, %c0_15] : memref<64x64xf32, #tpu.memory_space<vmem>>, vector<64x64xf32>
    %cst_16 = arith.constant dense<0.000000e+00> : vector<256x64xf32>
    %23 = tpu.matmul %21, %22, %cst_16 {dimension_numbers = #tpu.dot_dimension_numbers<[1], [0], [0], [1], [0, 0, 1, 1], [], []>} : vector<256x64xf32>, vector<64x64xf32>, vector<256x64xf32> -> vector<256x64xf32>
    %c0_17 = arith.constant 0 : index
    %c0_18 = arith.constant 0 : index
    %24 = vector.load %arg9[%c0_17, %c0_18] : memref<1x64xf32, #tpu.memory_space<vmem>>, vector<1x64xf32>
    %25 = vector.broadcast %24 : vector<1x64xf32> to vector<256x64xf32>
    %26 = arith.addf %23, %25 : vector<256x64xf32>
    %27 = math.tanh %26 : vector<256x64xf32>
    %c0_19 = arith.constant 0 : index
    %c0_20 = arith.constant 0 : index
    %28 = vector.load %arg10[%c0_19, %c0_20] : memref<64x64xf32, #tpu.memory_space<vmem>>, vector<64x64xf32>
    %cst_21 = arith.constant dense<0.000000e+00> : vector<256x64xf32>
    %29 = tpu.matmul %27, %28, %cst_21 {dimension_numbers = #tpu.dot_dimension_numbers<[1], [0], [0], [1], [0, 0, 1, 1], [], []>} : vector<256x64xf32>, vector<64x64xf32>, vector<256x64xf32> -> vector<256x64xf32>
    %c0_22 = arith.constant 0 : index
    %c0_23 = arith.constant 0 : index
    %30 = vector.load %arg11[%c0_22, %c0_23] : memref<1x64xf32, #tpu.memory_space<vmem>>, vector<1x64xf32>
    %31 = vector.broadcast %30 : vector<1x64xf32> to vector<256x64xf32>
    %32 = arith.addf %29, %31 : vector<256x64xf32>
    %33 = math.tanh %32 : vector<256x64xf32>
    %c0_24 = arith.constant 0 : index
    %c0_25 = arith.constant 0 : index
    %34 = vector.load %arg12[%c0_24, %c0_25] : memref<64x128xf32, #tpu.memory_space<vmem>>, vector<64x128xf32>
    %cst_26 = arith.constant dense<0.000000e+00> : vector<256x128xf32>
    %35 = tpu.matmul %33, %34, %cst_26 {dimension_numbers = #tpu.dot_dimension_numbers<[1], [0], [0], [1], [0, 0, 1, 1], [], []>} : vector<256x64xf32>, vector<64x128xf32>, vector<256x128xf32> -> vector<256x128xf32>
    %c0_27 = arith.constant 0 : index
    %c0_28 = arith.constant 0 : index
    %36 = vector.load %arg13[%c0_27, %c0_28] : memref<1x128xf32, #tpu.memory_space<vmem>>, vector<1x128xf32>
    %37 = vector.broadcast %36 : vector<1x128xf32> to vector<256x128xf32>
    %38 = arith.addf %35, %37 : vector<256x128xf32>
    %39 = arith.index_cast %1 : i32 to index
    %c0_29 = arith.constant 0 : index
    %40 = vector.load %arg14[%39, %c0_29] : memref<512x128xf32, #tpu.memory_space<vmem>>, vector<256x128xf32>
    tpu.vector_store %arg14[%39, %c0_29], %38 {strides = array<i32>} : memref<512x128xf32, #tpu.memory_space<vmem>>, vector<256x128xf32>,
    %c1_i32 = arith.constant 1 : i32
    %c256_i32_30 = arith.constant 256 : i32
    %41 = arith.muli %c1_i32, %c256_i32_30 : i32
    %42 = tpu.assume_multiple %41, 256 : i32
    %43 = arith.index_cast %42 : i32 to index
    %c0_31 = arith.constant 0 : index
    %44 = vector.load %arg1[%43, %c0_31] : memref<512x4xf32, #tpu.memory_space<vmem>>, vector<256x4xf32>
    %c0_32 = arith.constant 0 : index
    %c0_33 = arith.constant 0 : index
    %45 = vector.load %arg2[%c0_32, %c0_33] : memref<4x64xf32, #tpu.memory_space<vmem>>, vector<4x64xf32>
    %cst_34 = arith.constant dense<0.000000e+00> : vector<256x64xf32>
    %46 = tpu.matmul %44, %45, %cst_34 {dimension_numbers = #tpu.dot_dimension_numbers<[1], [0], [0], [1], [0, 0, 1, 1], [], []>} : vector<256x4xf32>, vector<4x64xf32>, vector<256x64xf32> -> vector<256x64xf32>
    %c0_35 = arith.constant 0 : index
    %c0_36 = arith.constant 0 : index
    %47 = vector.load %arg3[%c0_35, %c0_36] : memref<1x64xf32, #tpu.memory_space<vmem>>, vector<1x64xf32>
    %48 = vector.broadcast %47 : vector<1x64xf32> to vector<256x64xf32>
    %49 = arith.addf %46, %48 : vector<256x64xf32>
    %50 = math.tanh %49 : vector<256x64xf32>
    %c0_37 = arith.constant 0 : index
    %c0_38 = arith.constant 0 : index
    %51 = vector.load %arg4[%c0_37, %c0_38] : memref<64x64xf32, #tpu.memory_space<vmem>>, vector<64x64xf32>
    %cst_39 = arith.constant dense<0.000000e+00> : vector<256x64xf32>
    %52 = tpu.matmul %50, %51, %cst_39 {dimension_numbers = #tpu.dot_dimension_numbers<[1], [0], [0], [1], [0, 0, 1, 1], [], []>} : vector<256x64xf32>, vector<64x64xf32>, vector<256x64xf32> -> vector<256x64xf32>
    %c0_40 = arith.constant 0 : index
    %c0_41 = arith.constant 0 : index
    %53 = vector.load %arg5[%c0_40, %c0_41] : memref<1x64xf32, #tpu.memory_space<vmem>>, vector<1x64xf32>
    %54 = vector.broadcast %53 : vector<1x64xf32> to vector<256x64xf32>
    %55 = arith.addf %52, %54 : vector<256x64xf32>
    %56 = math.tanh %55 : vector<256x64xf32>
    %c0_42 = arith.constant 0 : index
    %c0_43 = arith.constant 0 : index
    %57 = vector.load %arg6[%c0_42, %c0_43] : memref<64x64xf32, #tpu.memory_space<vmem>>, vector<64x64xf32>
    %cst_44 = arith.constant dense<0.000000e+00> : vector<256x64xf32>
    %58 = tpu.matmul %56, %57, %cst_44 {dimension_numbers = #tpu.dot_dimension_numbers<[1], [0], [0], [1], [0, 0, 1, 1], [], []>} : vector<256x64xf32>, vector<64x64xf32>, vector<256x64xf32> -> vector<256x64xf32>
    %c0_45 = arith.constant 0 : index
    %c0_46 = arith.constant 0 : index
    %59 = vector.load %arg7[%c0_45, %c0_46] : memref<1x64xf32, #tpu.memory_space<vmem>>, vector<1x64xf32>
    %60 = vector.broadcast %59 : vector<1x64xf32> to vector<256x64xf32>
    %61 = arith.addf %58, %60 : vector<256x64xf32>
    %62 = math.tanh %61 : vector<256x64xf32>
    %c0_47 = arith.constant 0 : index
    %c0_48 = arith.constant 0 : index
    %63 = vector.load %arg8[%c0_47, %c0_48] : memref<64x64xf32, #tpu.memory_space<vmem>>, vector<64x64xf32>
    %cst_49 = arith.constant dense<0.000000e+00> : vector<256x64xf32>
    %64 = tpu.matmul %62, %63, %cst_49 {dimension_numbers = #tpu.dot_dimension_numbers<[1], [0], [0], [1], [0, 0, 1, 1], [], []>} : vector<256x64xf32>, vector<64x64xf32>, vector<256x64xf32> -> vector<256x64xf32>
    %c0_50 = arith.constant 0 : index
    %c0_51 = arith.constant 0 : index
    %65 = vector.load %arg9[%c0_50, %c0_51] : memref<1x64xf32, #tpu.memory_space<vmem>>, vector<1x64xf32>
    %66 = vector.broadcast %65 : vector<1x64xf32> to vector<256x64xf32>
    %67 = arith.addf %64, %66 : vector<256x64xf32>
    %68 = math.tanh %67 : vector<256x64xf32>
    %c0_52 = arith.constant 0 : index
    %c0_53 = arith.constant 0 : index
    %69 = vector.load %arg10[%c0_52, %c0_53] : memref<64x64xf32, #tpu.memory_space<vmem>>, vector<64x64xf32>
    %cst_54 = arith.constant dense<0.000000e+00> : vector<256x64xf32>
    %70 = tpu.matmul %68, %69, %cst_54 {dimension_numbers = #tpu.dot_dimension_numbers<[1], [0], [0], [1], [0, 0, 1, 1], [], []>} : vector<256x64xf32>, vector<64x64xf32>, vector<256x64xf32> -> vector<256x64xf32>
    %c0_55 = arith.constant 0 : index
    %c0_56 = arith.constant 0 : index
    %71 = vector.load %arg11[%c0_55, %c0_56] : memref<1x64xf32, #tpu.memory_space<vmem>>, vector<1x64xf32>
    %72 = vector.broadcast %71 : vector<1x64xf32> to vector<256x64xf32>
    %73 = arith.addf %70, %72 : vector<256x64xf32>
    %74 = math.tanh %73 : vector<256x64xf32>
    %c0_57 = arith.constant 0 : index
    %c0_58 = arith.constant 0 : index
    %75 = vector.load %arg12[%c0_57, %c0_58] : memref<64x128xf32, #tpu.memory_space<vmem>>, vector<64x128xf32>
    %cst_59 = arith.constant dense<0.000000e+00> : vector<256x128xf32>
    %76 = tpu.matmul %74, %75, %cst_59 {dimension_numbers = #tpu.dot_dimension_numbers<[1], [0], [0], [1], [0, 0, 1, 1], [], []>} : vector<256x64xf32>, vector<64x128xf32>, vector<256x128xf32> -> vector<256x128xf32>
    %c0_60 = arith.constant 0 : index
    %c0_61 = arith.constant 0 : index
    %77 = vector.load %arg13[%c0_60, %c0_61] : memref<1x128xf32, #tpu.memory_space<vmem>>, vector<1x128xf32>
    %78 = vector.broadcast %77 : vector<1x128xf32> to vector<256x128xf32>
    %79 = arith.addf %76, %78 : vector<256x128xf32>
    %80 = arith.index_cast %42 : i32 to index
    %c0_62 = arith.constant 0 : index
    %81 = vector.load %arg14[%80, %c0_62] : memref<512x128xf32, #tpu.memory_space<vmem>>, vector<256x128xf32>
    tpu.vector_store %arg14[%80, %c0_62], %79 {strides = array<i32>} : memref<512x128xf32, #tpu.memory_space<vmem>>, vector<256x128xf32>,
    %c2_i32 = arith.constant 2 : i32
    return
  }
  func.func @transform_0(%arg0: i32) -> (i32, i32) {
    %c0_i32 = arith.constant 0 : i32
    %c0_i32_0 = arith.constant 0 : i32
    return %arg0, %c0_i32 : i32, i32
  }
  func.func @transform_1(%arg0: i32) -> (i32, i32) {
    %c0_i32 = arith.constant 0 : i32
    %c0_i32_0 = arith.constant 0 : i32
    %c0_i32_1 = arith.constant 0 : i32
    return %c0_i32, %c0_i32_0 : i32, i32
  }
  func.func @transform_2(%arg0: i32) -> (i32, i32) {
    %c0_i32 = arith.constant 0 : i32
    %c0_i32_0 = arith.constant 0 : i32
    %c0_i32_1 = arith.constant 0 : i32
    return %c0_i32, %c0_i32_0 : i32, i32
  }
  func.func @transform_3(%arg0: i32) -> (i32, i32) {
    %c0_i32 = arith.constant 0 : i32
    %c0_i32_0 = arith.constant 0 : i32
    %c0_i32_1 = arith.constant 0 : i32
    return %c0_i32, %c0_i32_0 : i32, i32
  }
  func.func @transform_4(%arg0: i32) -> (i32, i32) {
    %c0_i32 = arith.constant 0 : i32
    %c0_i32_0 = arith.constant 0 : i32
    %c0_i32_1 = arith.constant 0 : i32
    return %c0_i32, %c0_i32_0 : i32, i32
  }
  func.func @transform_5(%arg0: i32) -> (i32, i32) {
    %c0_i32 = arith.constant 0 : i32
    %c0_i32_0 = arith.constant 0 : i32
    %c0_i32_1 = arith.constant 0 : i32
    return %c0_i32, %c0_i32_0 : i32, i32
  }
  func.func @transform_6(%arg0: i32) -> (i32, i32) {
    %c0_i32 = arith.constant 0 : i32
    %c0_i32_0 = arith.constant 0 : i32
    %c0_i32_1 = arith.constant 0 : i32
    return %c0_i32, %c0_i32_0 : i32, i32
  }
  func.func @transform_7(%arg0: i32) -> (i32, i32) {
    %c0_i32 = arith.constant 0 : i32
    %c0_i32_0 = arith.constant 0 : i32
    %c0_i32_1 = arith.constant 0 : i32
    return %c0_i32, %c0_i32_0 : i32, i32
  }
  func.func @transform_8(%arg0: i32) -> (i32, i32) {
    %c0_i32 = arith.constant 0 : i32
    %c0_i32_0 = arith.constant 0 : i32
    %c0_i32_1 = arith.constant 0 : i32
    return %c0_i32, %c0_i32_0 : i32, i32
  }
  func.func @transform_9(%arg0: i32) -> (i32, i32) {
    %c0_i32 = arith.constant 0 : i32
    %c0_i32_0 = arith.constant 0 : i32
    %c0_i32_1 = arith.constant 0 : i32
    return %c0_i32, %c0_i32_0 : i32, i32
  }
  func.func @transform_10(%arg0: i32) -> (i32, i32) {
    %c0_i32 = arith.constant 0 : i32
    %c0_i32_0 = arith.constant 0 : i32
    %c0_i32_1 = arith.constant 0 : i32
    return %c0_i32, %c0_i32_0 : i32, i32
  }
  func.func @transform_11(%arg0: i32) -> (i32, i32) {
    %c0_i32 = arith.constant 0 : i32
    %c0_i32_0 = arith.constant 0 : i32
    %c0_i32_1 = arith.constant 0 : i32
    return %c0_i32, %c0_i32_0 : i32, i32
  }
  func.func @transform_12(%arg0: i32) -> (i32, i32) {
    %c0_i32 = arith.constant 0 : i32
    %c0_i32_0 = arith.constant 0 : i32
    %c0_i32_1 = arith.constant 0 : i32
    return %c0_i32, %c0_i32_0 : i32, i32
  }
  func.func @transform_13(%arg0: i32) -> (i32, i32) {
    %c0_i32 = arith.constant 0 : i32
    %c0_i32_0 = arith.constant 0 : i32
    return %arg0, %c0_i32 : i32, i32
  }
}

</mosaic_0001>

<llo_original>
// kernel: neural_net_forward.1
$region0: #{neural_net_forward.1}
  #allocation0 [shape = 'u32[]', space=smem, size = 0x4, offset = 0x4, fixed_abs, tag = 'smem constant byte address 0x4 - core index']
  #allocation1 [shape = 'u32[72,128]{1,0:T(1,128)}', space=vmem, size = 0x9000, scoped, tag = 'internal scratch']
  %s0 = inlined_call_operand.vmem [shape: f32[1024,4], index: 0, kind: input, shape index: {}]
  %s1 = inlined_call_operand.vmem [shape: f32[4,64], index: 1, kind: input, shape index: {}]
  %s2 = inlined_call_operand.vmem [shape: f32[1,64], index: 2, kind: input, shape index: {}]
  %s3 = inlined_call_operand.vmem [shape: f32[64,64], index: 3, kind: input, shape index: {}]
  %s4 = inlined_call_operand.vmem [shape: f32[1,64], index: 4, kind: input, shape index: {}]
  %s5 = inlined_call_operand.vmem [shape: f32[64,64], index: 5, kind: input, shape index: {}]
  %s6 = inlined_call_operand.vmem [shape: f32[1,64], index: 6, kind: input, shape index: {}]
  %s7 = inlined_call_operand.vmem [shape: f32[64,64], index: 7, kind: input, shape index: {}]
  %s8 = inlined_call_operand.vmem [shape: f32[1,64], index: 8, kind: input, shape index: {}]
  %s9 = inlined_call_operand.vmem [shape: f32[64,64], index: 9, kind: input, shape index: {}]
  %s10 = inlined_call_operand.vmem [shape: f32[1,64], index: 10, kind: input, shape index: {}]
  %s11 = inlined_call_operand.vmem [shape: f32[64,128], index: 11, kind: input, shape index: {}]
  %s12 = inlined_call_operand.vmem [shape: f32[1,128], index: 12, kind: input, shape index: {}]
  %s13 = inlined_call_operand.vmem [shape: f32[1024,128], index: 13, kind: output, shape index: {}]
  %s14 = sld [smem:[#allocation0]]
  $region85: #{neural_net_forward.1} parent=0
    _
  %s16 = ssub.s32 1, %s14
  %s17 = scalar_select 0, %s16, %s14
  loop: start=0, step=1, limit=4
  $region2: #{neural_net_forward.1} parent=0 // loop_pre_header
    _
  $region3: #{neural_net_forward.1} parent=0 // loop_header
    %s19 = sphi 0, %s23
    %p20 = scmp.ge.s32.totalorder %s19, 4
    %s29 = sphi 0, %s31
    %s32 = sphi 0, %s29
    %s33 = sphi 0, %s32
    %s49 = sphi 0, %s33
    %s53 = sphi 0, %s53
    %s55 = sphi 0, %s53
    %s56 = sphi 0, %s55
    %s70 = sphi 0, %s56
    %s74 = sphi 0, %s74
    %s76 = sphi 0, %s74
    %s77 = sphi 0, %s76
    %s91 = sphi 0, %s77
    %s95 = sphi 0, %s95
    %s97 = sphi 0, %s95
    %s98 = sphi 0, %s97
    %s112 = sphi 0, %s98
    %s116 = sphi 0, %s116
    %s118 = sphi 0, %s116
    %s119 = sphi 0, %s118
    %s133 = sphi 0, %s119
    %s137 = sphi 0, %s137
    %s139 = sphi 0, %s137
    %s140 = sphi 0, %s139
    %s154 = sphi 0, %s140
    %s158 = sphi 0, %s158
    %s160 = sphi 0, %s158
    %s161 = sphi 0, %s160
    %s175 = sphi 0, %s161
    %s179 = sphi 0, %s179
    %s181 = sphi 0, %s179
    %s182 = sphi 0, %s181
    %s196 = sphi 0, %s182
    %s200 = sphi 0, %s200
    %s202 = sphi 0, %s200
    %s203 = sphi 0, %s202
    %s217 = sphi 0, %s203
    %s221 = sphi 0, %s221
    %s223 = sphi 0, %s221
    %s224 = sphi 0, %s223
    %s238 = sphi 0, %s224
    %s242 = sphi 0, %s242
    %s244 = sphi 0, %s242
    %s245 = sphi 0, %s244
    %s259 = sphi 0, %s245
    %s263 = sphi 0, %s263
    %s265 = sphi 0, %s263
    %s266 = sphi 0, %s265
    %s280 = sphi 0, %s266
    %s284 = sphi 0, %s284
    %s286 = sphi 0, %s284
    %s287 = sphi 0, %s286
    %s301 = sphi 0, %s287
    %s307 = sphi 0, %s309
    %s310 = sphi 0, %s307
    %s311 = sphi 0, %s310
    %s327 = sphi 0, %s311
  $region4: #{neural_net_forward.1} parent=0 // loop_header_branch
    %22 = sbr.rel (%p20) target = $region8
  $region5: #{neural_net_forward.1} parent=0 // loop_body
    %s24 = ssub.s32 %s19, 1
    %s25 = ssub.s32 %s19, 2
    %s26 = sadd.s32 %s19, 1
    %s27 = ssub.s32 %s19, %s26
    %p28 = scmp.eq.s32.totalorder %s27, 0
    %s30 = sadd.s32 %s29, 1
    %s31 = scalar_select %p28, %s29, %s30
    %p34 = pneg %p28
    %p35 = scmp.eq.s32.totalorder %s19, 1
    %p36 = por %p34, %p35
    %p37 = scmp.ne.s32.totalorder %s29, %s32
    %p38 = scmp.eq.s32.totalorder %s19, 0
    %p39 = por %p37, %p38
    %p40 = scmp.ne.s32.totalorder %s29, %s32
    %p41 = scmp.eq.s32.totalorder %s24, 1
    %p42 = por %p40, %p41
    %p43 = scmp.ne.s32.totalorder %s32, %s33
    %p44 = scmp.eq.s32.totalorder %s24, 0
    %p45 = por %p43, %p44
    %p46 = scmp.ne.s32.totalorder %s32, %s33
    %p47 = scmp.eq.s32.totalorder %s25, 1
    %p48 = por %p46, %p47
    %p50 = scmp.ne.s32.totalorder %s33, %s49
    %p51 = scmp.eq.s32.totalorder %s25, 0
    %p52 = por %p50, %p51
    %s54 = sadd.s32 %s53, 1
    %p57 = scmp.eq.s32.totalorder %s19, 1
    %p58 = scmp.ne.s32.totalorder %s53, %s55
    %p59 = scmp.eq.s32.totalorder %s19, 0
    %p60 = por %p58, %p59
    %p61 = scmp.ne.s32.totalorder %s53, %s55
    %p62 = scmp.eq.s32.totalorder %s24, 1
    %p63 = por %p61, %p62
    %p64 = scmp.ne.s32.totalorder %s55, %s56
    %p65 = scmp.eq.s32.totalorder %s24, 0
    %p66 = por %p64, %p65
    %p67 = scmp.ne.s32.totalorder %s55, %s56
    %p68 = scmp.eq.s32.totalorder %s25, 1
    %p69 = por %p67, %p68
    %p71 = scmp.ne.s32.totalorder %s56, %s70
    %p72 = scmp.eq.s32.totalorder %s25, 0
    %p73 = por %p71, %p72
    %s75 = sadd.s32 %s74, 1
    %p78 = scmp.eq.s32.totalorder %s19, 1
    %p79 = scmp.ne.s32.totalorder %s74, %s76
    %p80 = scmp.eq.s32.totalorder %s19, 0
    %p81 = por %p79, %p80
    %p82 = scmp.ne.s32.totalorder %s74, %s76
    %p83 = scmp.eq.s32.totalorder %s24, 1
    %p84 = por %p82, %p83
    %p85 = scmp.ne.s32.totalorder %s76, %s77
    %p86 = scmp.eq.s32.totalorder %s24, 0
    %p87 = por %p85, %p86
    %p88 = scmp.ne.s32.totalorder %s76, %s77
    %p89 = scmp.eq.s32.totalorder %s25, 1
    %p90 = por %p88, %p89
    %p92 = scmp.ne.s32.totalorder %s77, %s91
    %p93 = scmp.eq.s32.totalorder %s25, 0
    %p94 = por %p92, %p93
    %s96 = sadd.s32 %s95, 1
    %p99 = scmp.eq.s32.totalorder %s19, 1
    %p100 = scmp.ne.s32.totalorder %s95, %s97
    %p101 = scmp.eq.s32.totalorder %s19, 0
    %p102 = por %p100, %p101
    %p103 = scmp.ne.s32.totalorder %s95, %s97
    %p104 = scmp.eq.s32.totalorder %s24, 1
    %p105 = por %p103, %p104
    %p106 = scmp.ne.s32.totalorder %s97, %s98
    %p107 = scmp.eq.s32.totalorder %s24, 0
    %p108 = por %p106, %p107
    %p109 = scmp.ne.s32.totalorder %s97, %s98
    %p110 = scmp.eq.s32.totalorder %s25, 1
    %p111 = por %p109, %p110
    %p113 = scmp.ne.s32.totalorder %s98, %s112
    %p114 = scmp.eq.s32.totalorder %s25, 0
    %p115 = por %p113, %p114
    %s117 = sadd.s32 %s116, 1
    %p120 = scmp.eq.s32.totalorder %s19, 1
    %p121 = scmp.ne.s32.totalorder %s116, %s118
    %p122 = scmp.eq.s32.totalorder %s19, 0
    %p123 = por %p121, %p122
    %p124 = scmp.ne.s32.totalorder %s116, %s118
    %p125 = scmp.eq.s32.totalorder %s24, 1
    %p126 = por %p124, %p125
    %p127 = scmp.ne.s32.totalorder %s118, %s119
    %p128 = scmp.eq.s32.totalorder %s24, 0
    %p129 = por %p127, %p128
    %p130 = scmp.ne.s32.totalorder %s118, %s119
    %p131 = scmp.eq.s32.totalorder %s25, 1
    %p132 = por %p130, %p131
    %p134 = scmp.ne.s32.totalorder %s119, %s133
    %p135 = scmp.eq.s32.totalorder %s25, 0
    %p136 = por %p134, %p135
    %s138 = sadd.s32 %s137, 1
    %p141 = scmp.eq.s32.totalorder %s19, 1
    %p142 = scmp.ne.s32.totalorder %s137, %s139
    %p143 = scmp.eq.s32.totalorder %s19, 0
    %p144 = por %p142, %p143
    %p145 = scmp.ne.s32.totalorder %s137, %s139
    %p146 = scmp.eq.s32.totalorder %s24, 1
    %p147 = por %p145, %p146
    %p148 = scmp.ne.s32.totalorder %s139, %s140
    %p149 = scmp.eq.s32.totalorder %s24, 0
    %p150 = por %p148, %p149
    %p151 = scmp.ne.s32.totalorder %s139, %s140
    %p152 = scmp.eq.s32.totalorder %s25, 1
    %p153 = por %p151, %p152
    %p155 = scmp.ne.s32.totalorder %s140, %s154
    %p156 = scmp.eq.s32.totalorder %s25, 0
    %p157 = por %p155, %p156
    %s159 = sadd.s32 %s158, 1
    %p162 = scmp.eq.s32.totalorder %s19, 1
    %p163 = scmp.ne.s32.totalorder %s158, %s160
    %p164 = scmp.eq.s32.totalorder %s19, 0
    %p165 = por %p163, %p164
    %p166 = scmp.ne.s32.totalorder %s158, %s160
    %p167 = scmp.eq.s32.totalorder %s24, 1
    %p168 = por %p166, %p167
    %p169 = scmp.ne.s32.totalorder %s160, %s161
    %p170 = scmp.eq.s32.totalorder %s24, 0
    %p171 = por %p169, %p170
    %p172 = scmp.ne.s32.totalorder %s160, %s161
    %p173 = scmp.eq.s32.totalorder %s25, 1
    %p174 = por %p172, %p173
    %p176 = scmp.ne.s32.totalorder %s161, %s175
    %p177 = scmp.eq.s32.totalorder %s25, 0
    %p178 = por %p176, %p177
    %s180 = sadd.s32 %s179, 1
    %p183 = scmp.eq.s32.totalorder %s19, 1
    %p184 = scmp.ne.s32.totalorder %s179, %s181
    %p185 = scmp.eq.s32.totalorder %s19, 0
    %p186 = por %p184, %p185
    %p187 = scmp.ne.s32.totalorder %s179, %s181
    %p188 = scmp.eq.s32.totalorder %s24, 1
    %p189 = por %p187, %p188
    %p190 = scmp.ne.s32.totalorder %s181, %s182
    %p191 = scmp.eq.s32.totalorder %s24, 0
    %p192 = por %p190, %p191
    %p193 = scmp.ne.s32.totalorder %s181, %s182
    %p194 = scmp.eq.s32.totalorder %s25, 1
    %p195 = por %p193, %p194
    %p197 = scmp.ne.s32.totalorder %s182, %s196
    %p198 = scmp.eq.s32.totalorder %s25, 0
    %p199 = por %p197, %p198
    %s201 = sadd.s32 %s200, 1
    %p204 = scmp.eq.s32.totalorder %s19, 1
    %p205 = scmp.ne.s32.totalorder %s200, %s202
    %p206 = scmp.eq.s32.totalorder %s19, 0
    %p207 = por %p205, %p206
    %p208 = scmp.ne.s32.totalorder %s200, %s202
    %p209 = scmp.eq.s32.totalorder %s24, 1
    %p210 = por %p208, %p209
    %p211 = scmp.ne.s32.totalorder %s202, %s203
    %p212 = scmp.eq.s32.totalorder %s24, 0
    %p213 = por %p211, %p212
    %p214 = scmp.ne.s32.totalorder %s202, %s203
    %p215 = scmp.eq.s32.totalorder %s25, 1
    %p216 = por %p214, %p215
    %p218 = scmp.ne.s32.totalorder %s203, %s217
    %p219 = scmp.eq.s32.totalorder %s25, 0
    %p220 = por %p218, %p219
    %s222 = sadd.s32 %s221, 1
    %p225 = scmp.eq.s32.totalorder %s19, 1
    %p226 = scmp.ne.s32.totalorder %s221, %s223
    %p227 = scmp.eq.s32.totalorder %s19, 0
    %p228 = por %p226, %p227
    %p229 = scmp.ne.s32.totalorder %s221, %s223
    %p230 = scmp.eq.s32.totalorder %s24, 1
    %p231 = por %p229, %p230
    %p232 = scmp.ne.s32.totalorder %s223, %s224
    %p233 = scmp.eq.s32.totalorder %s24, 0
    %p234 = por %p232, %p233
    %p235 = scmp.ne.s32.totalorder %s223, %s224
    %p236 = scmp.eq.s32.totalorder %s25, 1
    %p237 = por %p235, %p236
    %p239 = scmp.ne.s32.totalorder %s224, %s238
    %p240 = scmp.eq.s32.totalorder %s25, 0
    %p241 = por %p239, %p240
    %s243 = sadd.s32 %s242, 1
    %p246 = scmp.eq.s32.totalorder %s19, 1
    %p247 = scmp.ne.s32.totalorder %s242, %s244
    %p248 = scmp.eq.s32.totalorder %s19, 0
    %p249 = por %p247, %p248
    %p250 = scmp.ne.s32.totalorder %s242, %s244
    %p251 = scmp.eq.s32.totalorder %s24, 1
    %p252 = por %p250, %p251
    %p253 = scmp.ne.s32.totalorder %s244, %s245
    %p254 = scmp.eq.s32.totalorder %s24, 0
    %p255 = por %p253, %p254
    %p256 = scmp.ne.s32.totalorder %s244, %s245
    %p257 = scmp.eq.s32.totalorder %s25, 1
    %p258 = por %p256, %p257
    %p260 = scmp.ne.s32.totalorder %s245, %s259
    %p261 = scmp.eq.s32.totalorder %s25, 0
    %p262 = por %p260, %p261
    %s264 = sadd.s32 %s263, 1
    %p267 = scmp.eq.s32.totalorder %s19, 1
    %p268 = scmp.ne.s32.totalorder %s263, %s265
    %p269 = scmp.eq.s32.totalorder %s19, 0
    %p270 = por %p268, %p269
    %p271 = scmp.ne.s32.totalorder %s263, %s265
    %p272 = scmp.eq.s32.totalorder %s24, 1
    %p273 = por %p271, %p272
    %p274 = scmp.ne.s32.totalorder %s265, %s266
    %p275 = scmp.eq.s32.totalorder %s24, 0
    %p276 = por %p274, %p275
    %p277 = scmp.ne.s32.totalorder %s265, %s266
    %p278 = scmp.eq.s32.totalorder %s25, 1
    %p279 = por %p277, %p278
    %p281 = scmp.ne.s32.totalorder %s266, %s280
    %p282 = scmp.eq.s32.totalorder %s25, 0
    %p283 = por %p281, %p282
    %s285 = sadd.s32 %s284, 1
    %p288 = scmp.eq.s32.totalorder %s19, 1
    %p289 = scmp.ne.s32.totalorder %s284, %s286
    %p290 = scmp.eq.s32.totalorder %s19, 0
    %p291 = por %p289, %p290
    %p292 = scmp.ne.s32.totalorder %s284, %s286
    %p293 = scmp.eq.s32.totalorder %s24, 1
    %p294 = por %p292, %p293
    %p295 = scmp.ne.s32.totalorder %s286, %s287
    %p296 = scmp.eq.s32.totalorder %s24, 0
    %p297 = por %p295, %p296
    %p298 = scmp.ne.s32.totalorder %s286, %s287
    %p299 = scmp.eq.s32.totalorder %s25, 1
    %p300 = por %p298, %p299
    %p302 = scmp.ne.s32.totalorder %s287, %s301
    %p303 = scmp.eq.s32.totalorder %s25, 0
    %p304 = por %p302, %p303
    %s305 = ssub.s32 %s19, %s26
    %p306 = scmp.eq.s32.totalorder %s305, 0
    %s308 = sadd.s32 %s307, 1
    %s309 = scalar_select %p306, %s307, %s308
    %p312 = pneg %p306
    %p313 = scmp.eq.s32.totalorder %s19, 1
    %p314 = por %p312, %p313
    %p315 = scmp.ne.s32.totalorder %s307, %s310
    %p316 = scmp.eq.s32.totalorder %s19, 0
    %p317 = por %p315, %p316
    %p318 = scmp.ne.s32.totalorder %s307, %s310
    %p319 = scmp.eq.s32.totalorder %s24, 1
    %p320 = por %p318, %p319
    %p321 = scmp.ne.s32.totalorder %s310, %s311
    %p322 = scmp.eq.s32.totalorder %s24, 0
    %p323 = por %p321, %p322
    %p324 = scmp.ne.s32.totalorder %s310, %s311
    %p325 = scmp.eq.s32.totalorder %s25, 1
    %p326 = por %p324, %p325
    %p328 = scmp.ne.s32.totalorder %s311, %s327
    %p329 = scmp.eq.s32.totalorder %s25, 0
    %p330 = por %p328, %p329
    %p331 = scmp.le.s32.totalorder 1, %s19
    %p332 = scmp.lt.s32.totalorder %s19, 3
    %p333 = pnand %p331, %p332
    %p334 = pneg %p333
    // Predicated region
    $region9: #{neural_net_forward.1} parent=5 // pred_check
      _
    $region10: #{neural_net_forward.1} parent=5 // pred_check_branch
      %336 = sbr.rel (%p333) target = $region12
    $region11: #{neural_net_forward.1} parent=5 // pred_region
      %s337 = ssub.s32 %s19, 1
      // Predicated region
      $region13: #{neural_net_forward.1} parent=11 // pred_check
        %p338 = pneg %p66
      $region14: #{neural_net_forward.1} parent=11 // pred_check_branch
        %340 = sbr.rel (%p338) target = $region16
      $region15: #{neural_net_forward.1} parent=11 // pred_region
        _
      $region16: #{neural_net_forward.1} parent=11 // pred_fallthru
        _
      // Predicated region
      $region17: #{neural_net_forward.1} parent=11 // pred_check
        %p341 = pneg %p87
      $region18: #{neural_net_forward.1} parent=11 // pred_check_branch
        %343 = sbr.rel (%p341) target = $region20
      $region19: #{neural_net_forward.1} parent=11 // pred_region
        _
      $region20: #{neural_net_forward.1} parent=11 // pred_fallthru
        _
      // Predicated region
      $region21: #{neural_net_forward.1} parent=11 // pred_check
        %p344 = pneg %p108
      $region22: #{neural_net_forward.1} parent=11 // pred_check_branch
        %346 = sbr.rel (%p344) target = $region24
      $region23: #{neural_net_forward.1} parent=11 // pred_region
        _
      $region24: #{neural_net_forward.1} parent=11 // pred_fallthru
        _
      // Predicated region
      $region25: #{neural_net_forward.1} parent=11 // pred_check
        %p347 = pneg %p129
      $region26: #{neural_net_forward.1} parent=11 // pred_check_branch
        %349 = sbr.rel (%p347) target = $region28
      $region27: #{neural_net_forward.1} parent=11 // pred_region
        _
      $region28: #{neural_net_forward.1} parent=11 // pred_fallthru
        _
      // Predicated region
      $region29: #{neural_net_forward.1} parent=11 // pred_check
        %p350 = pneg %p150
      $region30: #{neural_net_forward.1} parent=11 // pred_check_branch
        %352 = sbr.rel (%p350) target = $region32
      $region31: #{neural_net_forward.1} parent=11 // pred_region
        _
      $region32: #{neural_net_forward.1} parent=11 // pred_fallthru
        _
      // Predicated region
      $region33: #{neural_net_forward.1} parent=11 // pred_check
        %p353 = pneg %p171
      $region34: #{neural_net_forward.1} parent=11 // pred_check_branch
        %355 = sbr.rel (%p353) target = $region36
      $region35: #{neural_net_forward.1} parent=11 // pred_region
        _
      $region36: #{neural_net_forward.1} parent=11 // pred_fallthru
        _
      // Predicated region
      $region37: #{neural_net_forward.1} parent=11 // pred_check
        %p356 = pneg %p192
      $region38: #{neural_net_forward.1} parent=11 // pred_check_branch
        %358 = sbr.rel (%p356) target = $region40
      $region39: #{neural_net_forward.1} parent=11 // pred_region
        _
      $region40: #{neural_net_forward.1} parent=11 // pred_fallthru
        _
      // Predicated region
      $region41: #{neural_net_forward.1} parent=11 // pred_check
        %p359 = pneg %p213
      $region42: #{neural_net_forward.1} parent=11 // pred_check_branch
        %361 = sbr.rel (%p359) target = $region44
      $region43: #{neural_net_forward.1} parent=11 // pred_region
        _
      $region44: #{neural_net_forward.1} parent=11 // pred_fallthru
        _
      // Predicated region
      $region45: #{neural_net_forward.1} parent=11 // pred_check
        %p362 = pneg %p234
      $region46: #{neural_net_forward.1} parent=11 // pred_check_branch
        %364 = sbr.rel (%p362) target = $region48
      $region47: #{neural_net_forward.1} parent=11 // pred_region
        _
      $region48: #{neural_net_forward.1} parent=11 // pred_fallthru
        _
      // Predicated region
      $region49: #{neural_net_forward.1} parent=11 // pred_check
        %p365 = pneg %p255
      $region50: #{neural_net_forward.1} parent=11 // pred_check_branch
        %367 = sbr.rel (%p365) target = $region52
      $region51: #{neural_net_forward.1} parent=11 // pred_region
        _
      $region52: #{neural_net_forward.1} parent=11 // pred_fallthru
        _
      // Predicated region
      $region53: #{neural_net_forward.1} parent=11 // pred_check
        %p368 = pneg %p276
      $region54: #{neural_net_forward.1} parent=11 // pred_check_branch
        %370 = sbr.rel (%p368) target = $region56
      $region55: #{neural_net_forward.1} parent=11 // pred_region
        _
      $region56: #{neural_net_forward.1} parent=11 // pred_fallthru
        _
      // Predicated region
      $region57: #{neural_net_forward.1} parent=11 // pred_check
        %p371 = pneg %p297
      $region58: #{neural_net_forward.1} parent=11 // pred_check_branch
        %373 = sbr.rel (%p371) target = $region60
      $region59: #{neural_net_forward.1} parent=11 // pred_region
        _
      $region60: #{neural_net_forward.1} parent=11 // pred_fallthru
        _
    $region12: #{neural_net_forward.1} parent=5 // pred_fallthru
      _
    %p374 = scmp.lt.s32.totalorder %s19, 2
    // Predicated region
    $region61: #{neural_net_forward.1} parent=5 // pred_check
      %p375 = pneg %p374
    $region62: #{neural_net_forward.1} parent=5 // pred_check_branch
      %377 = sbr.rel (%p375) target = $region64
    $region63: #{neural_net_forward.1} parent=5 // pred_region
      // Predicated region
      $region65: #{neural_net_forward.1} parent=63 // pred_check
        %p378 = pneg %p39
      $region66: #{neural_net_forward.1} parent=63 // pred_check_branch
        %380 = sbr.rel (%p378) target = $region68
      $region67: #{neural_net_forward.1} parent=63 // pred_region
        %s381 = smul.u32 64, %s19
        %p382 = scmp.lt.s32.totalorder %s381, 127
        %s383 = scalar_select %p382, %s381, 127
        %s384 = smul.addr %s383, 8
        %s385 = scalar_lea.vmem %s0, %s384
        %s386 = smul.u32 64, %s19
      $region68: #{neural_net_forward.1} parent=63 // pred_fallthru
        _
    $region64: #{neural_net_forward.1} parent=5 // pred_fallthru
      _
    %p387 = scmp.le.s32.totalorder 1, %s19
    %p388 = scmp.lt.s32.totalorder %s19, 3
    %p389 = pnand %p387, %p388
    %p390 = pneg %p389
    // Predicated region
    $region69: #{neural_net_forward.1} parent=5 // pred_check
      _
    $region70: #{neural_net_forward.1} parent=5 // pred_check_branch
      %392 = sbr.rel (%p389) target = $region72
    $region71: #{neural_net_forward.1} parent=5 // pred_region
      %s393 = ssub.s32 %s19, 1
      %s394 = smul.u32 64, %s24
      %p395 = scmp.lt.s32.totalorder %s394, 127
      %s396 = scalar_select %p395, %s394, 127
      %s397 = smul.addr %s396, 8
      %s398 = scalar_lea.vmem %s0, %s397
      %p399 = pneg %p45
      %p400 = pneg %p42
      %p401 = pneg %p66
      %p402 = pneg %p63
      %p403 = pneg %p87
      %p404 = pneg %p84
      %p405 = pneg %p108
      %p406 = pneg %p105
      %p407 = pneg %p129
      %p408 = pneg %p126
      %p409 = pneg %p150
      %p410 = pneg %p147
      %p411 = pneg %p171
      %p412 = pneg %p168
      %p413 = pneg %p192
      %p414 = pneg %p189
      %p415 = pneg %p213
      %p416 = pneg %p210
      %p417 = pneg %p234
      %p418 = pneg %p231
      %p419 = pneg %p255
      %p420 = pneg %p252
      %p421 = pneg %p276
      %p422 = pneg %p273
      %p423 = pneg %p297
      %p424 = pneg %p294
      %p425 = pneg %p323
      %p426 = pneg %p320
      %s427 = smul.u32 64, %s24
      %p428 = scmp.lt.s32.totalorder %s427, 127
      %s429 = scalar_select %p428, %s427, 127
      %s430 = smul.addr %s429, 8
      %s431 = scalar_lea.vmem %s13, %s430
      %s432 = smul.u32 64, %s24
      %p433 = scmp.lt.s32.totalorder %s432, 127
      %s434 = scalar_select %p433, %s432, 127
      %s435 = smul.addr %s434, 8
      %s436 = scalar_lea.vmem %s0, %s435
      %s437 = smul.u32 64, %s24
      %s438 = smul.u32 64, %s24
      %p439 = scmp.lt.s32.totalorder %s438, 127
      %s440 = scalar_select %p439, %s438, 127
      %s441 = smul.addr %s440, 8
      %s442 = scalar_lea.vmem %s13, %s441
      %s443 = smul.u32 64, %s24
      %v444 = vld [vmem:[%s436] sm:$0xff]
      %v445 = vld [vmem:[%s436 + $0x8] sm:$0xff]
      %v446 = vld [vmem:[%s436 + $0x10] sm:$0xff]
      %v447 = vld [vmem:[%s436 + $0x18] sm:$0xff]
      %v448 = vld [vmem:[%s436 + $0x20] sm:$0xff]
      %v449 = vld [vmem:[%s436 + $0x28] sm:$0xff]
      %v450 = vld [vmem:[%s436 + $0x30] sm:$0xff]
      %v451 = vld [vmem:[%s436 + $0x38] sm:$0xff]
      %v452 = vld [vmem:[%s436 + $0x40] sm:$0xff]
      %v453 = vld [vmem:[%s436 + $0x48] sm:$0xff]
      %v454 = vld [vmem:[%s436 + $0x50] sm:$0xff]
      %v455 = vld [vmem:[%s436 + $0x58] sm:$0xff]
      %v456 = vld [vmem:[%s436 + $0x60] sm:$0xff]
      %v457 = vld [vmem:[%s436 + $0x68] sm:$0xff]
      %v458 = vld [vmem:[%s436 + $0x70] sm:$0xff]
      %v459 = vld [vmem:[%s436 + $0x78] sm:$0xff]
      %v460 = vld [vmem:[%s436 + $0x80] sm:$0xff]
      %v461 = vld [vmem:[%s436 + $0x88] sm:$0xff]
      %v462 = vld [vmem:[%s436 + $0x90] sm:$0xff]
      %v463 = vld [vmem:[%s436 + $0x98] sm:$0xff]
      %v464 = vld [vmem:[%s436 + $0xa0] sm:$0xff]
      %v465 = vld [vmem:[%s436 + $0xa8] sm:$0xff]
      %v466 = vld [vmem:[%s436 + $0xb0] sm:$0xff]
      %v467 = vld [vmem:[%s436 + $0xb8] sm:$0xff]
      %v468 = vld [vmem:[%s436 + $0xc0] sm:$0xff]
      %v469 = vld [vmem:[%s436 + $0xc8] sm:$0xff]
      %v470 = vld [vmem:[%s436 + $0xd0] sm:$0xff]
      %v471 = vld [vmem:[%s436 + $0xd8] sm:$0xff]
      %v472 = vld [vmem:[%s436 + $0xe0] sm:$0xff]
      %v473 = vld [vmem:[%s436 + $0xe8] sm:$0xff]
      %v474 = vld [vmem:[%s436 + $0xf0] sm:$0xff]
      %v475 = vld [vmem:[%s436 + $0xf8] sm:$0xff]
      %v476 = vld [vmem:[%s1] sm:$0xf]
      %v477 = vld [vmem:[%s2] sm:$0x1]
      %v479 = vperm.slane %v477, 0
      %vm481 = vcmask 31744
      %v483 = vsel %vm481, %v444, 0
      %v486 = vsel %vm481, %v445, 0
      %v489 = vsel %vm481, %v446, 0
      %v492 = vsel %vm481, %v447, 0
      %v495 = vsel %vm481, %v448, 0
      %v498 = vsel %vm481, %v449, 0
      %v501 = vsel %vm481, %v450, 0
      %v504 = vsel %vm481, %v451, 0
      %v507 = vsel %vm481, %v452, 0
      %v510 = vsel %vm481, %v453, 0
      %v513 = vsel %vm481, %v454, 0
      %v516 = vsel %vm481, %v455, 0
      %v519 = vsel %vm481, %v456, 0
      %v522 = vsel %vm481, %v457, 0
      %v525 = vsel %vm481, %v458, 0
      %v528 = vsel %vm481, %v459, 0
      %v531 = vsel %vm481, %v460, 0
      %v534 = vsel %vm481, %v461, 0
      %v537 = vsel %vm481, %v462, 0
      %v540 = vsel %vm481, %v463, 0
      %v543 = vsel %vm481, %v464, 0
      %v546 = vsel %vm481, %v465, 0
      %v549 = vsel %vm481, %v466, 0
      %v552 = vsel %vm481, %v467, 0
      %v555 = vsel %vm481, %v468, 0
      %v558 = vsel %vm481, %v469, 0
      %v561 = vsel %vm481, %v470, 0
      %v564 = vsel %vm481, %v471, 0
      %v567 = vsel %vm481, %v472, 0
      %v570 = vsel %vm481, %v473, 0
      %v573 = vsel %vm481, %v474, 0
      %v576 = vsel %vm481, %v475, 0
      %vm578 = vcmask 1043456
      %v580 = vsel %vm578, %v476, 0
      %582 = vmatpush.msra.mxu0 0.0
      %583 = vmatpush.msra.mxu0 0.0
      %584 = vmatpush.msra.mxu0 0.0
      %585 = vmatpush.msra.mxu0 0.0
      %586 = vmatpush.msra.mxu0 0.0
      %587 = vmatpush.msra.mxu0 0.0
      %588 = vmatpush.msra.mxu0 0.0
      %589 = vmatpush.msra.mxu0 0.0
      %590 = vmatpush.msra.mxu0 0.0
      %591 = vmatpush.msra.mxu0 0.0
      %592 = vmatpush.msra.mxu0 0.0
      %593 = vmatpush.msra.mxu0 0.0
      %594 = vmatpush.msra.mxu0 0.0
      %595 = vmatpush.msra.mxu0 0.0
      %596 = vmatpush.msra.mxu0 0.0
      %597 = vmatpush.msra.mxu0 %v580
      %598 = vmatmul.f32.gmra.mxu0 %v483
      %v599 = vpop.f32.mrf.mxu0
      %v600 = vadd.f32 %v479, %v599
      %601 = vmatmul.f32.gmra.mxu0 %v486
      %v602 = vpop.f32.mrf.mxu0
      %v603 = vadd.f32 %v479, %v602
      %604 = vmatmul.f32.gmra.mxu0 %v489
      %v605 = vpop.f32.mrf.mxu0
      %v606 = vadd.f32 %v479, %v605
      %607 = vmatmul.f32.gmra.mxu0 %v492
      %v608 = vpop.f32.mrf.mxu0
      %v609 = vadd.f32 %v479, %v608
      %610 = vmatmul.f32.gmra.mxu0 %v495
      %v611 = vpop.f32.mrf.mxu0
      %v612 = vadd.f32 %v479, %v611
      %613 = vmatmul.f32.gmra.mxu0 %v498
      %v614 = vpop.f32.mrf.mxu0
      %v615 = vadd.f32 %v479, %v614
      %616 = vmatmul.f32.gmra.mxu0 %v501
      %v617 = vpop.f32.mrf.mxu0
      %v618 = vadd.f32 %v479, %v617
      %619 = vmatmul.f32.gmra.mxu0 %v504
      %v620 = vpop.f32.mrf.mxu0
      %v621 = vadd.f32 %v479, %v620
      %622 = vmatmul.f32.gmra.mxu0 %v507
      %v623 = vpop.f32.mrf.mxu0
      %v624 = vadd.f32 %v479, %v623
      %625 = vmatmul.f32.gmra.mxu0 %v510
      %v626 = vpop.f32.mrf.mxu0
      %v627 = vadd.f32 %v479, %v626
      %628 = vmatmul.f32.gmra.mxu0 %v513
      %v629 = vpop.f32.mrf.mxu0
      %v630 = vadd.f32 %v479, %v629
      %631 = vmatmul.f32.gmra.mxu0 %v516
      %v632 = vpop.f32.mrf.mxu0
      %v633 = vadd.f32 %v479, %v632
      %634 = vmatmul.f32.gmra.mxu0 %v519
      %v635 = vpop.f32.mrf.mxu0
      %v636 = vadd.f32 %v479, %v635
      %637 = vmatmul.f32.gmra.mxu0 %v522
      %v638 = vpop.f32.mrf.mxu0
      %v639 = vadd.f32 %v479, %v638
      %640 = vmatmul.f32.gmra.mxu0 %v525
      %v641 = vpop.f32.mrf.mxu0
      %v642 = vadd.f32 %v479, %v641
      %643 = vmatmul.f32.gmra.mxu0 %v528
      %v644 = vpop.f32.mrf.mxu0
      %v645 = vadd.f32 %v479, %v644
      %646 = vmatmul.f32.gmra.mxu0 %v531
      %v647 = vpop.f32.mrf.mxu0
      %v648 = vadd.f32 %v479, %v647
      %649 = vmatmul.f32.gmra.mxu0 %v534
      %v650 = vpop.f32.mrf.mxu0
      %v651 = vadd.f32 %v479, %v650
      %652 = vmatmul.f32.gmra.mxu0 %v537
      %v653 = vpop.f32.mrf.mxu0
      %v654 = vadd.f32 %v479, %v653
      %655 = vmatmul.f32.gmra.mxu0 %v540
      %v656 = vpop.f32.mrf.mxu0
      %v657 = vadd.f32 %v479, %v656
      %658 = vmatmul.f32.gmra.mxu0 %v543
      %v659 = vpop.f32.mrf.mxu0
      %v660 = vadd.f32 %v479, %v659
      %661 = vmatmul.f32.gmra.mxu0 %v546
      %v662 = vpop.f32.mrf.mxu0
      %v663 = vadd.f32 %v479, %v662
      %664 = vmatmul.f32.gmra.mxu0 %v549
      %v665 = vpop.f32.mrf.mxu0
      %v666 = vadd.f32 %v479, %v665
      %667 = vmatmul.f32.gmra.mxu0 %v552
      %v668 = vpop.f32.mrf.mxu0
      %v669 = vadd.f32 %v479, %v668
      %670 = vmatmul.f32.gmra.mxu0 %v555
      %v671 = vpop.f32.mrf.mxu0
      %v672 = vadd.f32 %v479, %v671
      %673 = vmatmul.f32.gmra.mxu0 %v558
      %v674 = vpop.f32.mrf.mxu0
      %v675 = vadd.f32 %v479, %v674
      %676 = vmatmul.f32.gmra.mxu0 %v561
      %v677 = vpop.f32.mrf.mxu0
      %v678 = vadd.f32 %v479, %v677
      %679 = vmatmul.f32.gmra.mxu0 %v564
      %v680 = vpop.f32.mrf.mxu0
      %v681 = vadd.f32 %v479, %v680
      %682 = vmatmul.f32.gmra.mxu0 %v567
      %v683 = vpop.f32.mrf.mxu0
      %v684 = vadd.f32 %v479, %v683
      %685 = vmatmul.f32.gmra.mxu0 %v570
      %v686 = vpop.f32.mrf.mxu0
      %v687 = vadd.f32 %v479, %v686
      %688 = vmatmul.f32.gmra.mxu0 %v573
      %v689 = vpop.f32.mrf.mxu0
      %v690 = vadd.f32 %v479, %v689
      %691 = vmatmul.f32.gmra.mxu0 %v576
      %v692 = vpop.f32.mrf.mxu0
      %v693 = vadd.f32 %v479, %v692
      %694 = vdwg.mxu0
      %v695 = vtanh.pop %v600
      %v696 = vtanh.pop %v603
      %v697 = vtanh.pop %v606
      %v698 = vtanh.pop %v609
      %v699 = vtanh.pop %v612
      %v700 = vtanh.pop %v615
      %v701 = vtanh.pop %v618
      %v702 = vtanh.pop %v621
      %v703 = vtanh.pop %v624
      %v704 = vtanh.pop %v627
      %v705 = vtanh.pop %v630
      %v706 = vtanh.pop %v633
      %v707 = vtanh.pop %v636
      %v708 = vtanh.pop %v639
      %v709 = vtanh.pop %v642
      %v710 = vtanh.pop %v645
      %v711 = vtanh.pop %v648
      %v712 = vtanh.pop %v651
      %v713 = vtanh.pop %v654
      %v714 = vtanh.pop %v657
      %v715 = vtanh.pop %v660
      %v716 = vtanh.pop %v663
      %v717 = vtanh.pop %v666
      %v718 = vtanh.pop %v669
      %v719 = vtanh.pop %v672
      %v720 = vtanh.pop %v675
      %v721 = vtanh.pop %v678
      %v722 = vtanh.pop %v681
      %v723 = vtanh.pop %v684
      %v724 = vtanh.pop %v687
      %v725 = vtanh.pop %v690
      %v726 = vtanh.pop %v693
      %v727 = vld [vmem:[%s3] sm:$0xff]
      %v728 = vld [vmem:[%s3 + $0x8] sm:$0xff]
      %v729 = vld [vmem:[%s3 + $0x10] sm:$0xff]
      %v730 = vld [vmem:[%s3 + $0x18] sm:$0xff]
      %v731 = vld [vmem:[%s3 + $0x20] sm:$0xff]
      %v732 = vld [vmem:[%s3 + $0x28] sm:$0xff]
      %v733 = vld [vmem:[%s3 + $0x30] sm:$0xff]
      %v734 = vld [vmem:[%s3 + $0x38] sm:$0xff]
      %v735 = vld [vmem:[%s4] sm:$0x1]
      %v737 = vperm.slane %v735, 0
      %vm739 = vcmask 523264
      %v741 = vsel %vm739, %v695, 0
      %v744 = vsel %vm739, %v696, 0
      %v747 = vsel %vm739, %v697, 0
      %v750 = vsel %vm739, %v698, 0
      %v753 = vsel %vm739, %v699, 0
      %v756 = vsel %vm739, %v700, 0
      %v759 = vsel %vm739, %v701, 0
      %v762 = vsel %vm739, %v702, 0
      %v765 = vsel %vm739, %v703, 0
      %v768 = vsel %vm739, %v704, 0
      %v771 = vsel %vm739, %v705, 0
      %v774 = vsel %vm739, %v706, 0
      %v777 = vsel %vm739, %v707, 0
      %v780 = vsel %vm739, %v708, 0
      %v783 = vsel %vm739, %v709, 0
      %v786 = vsel %vm739, %v710, 0
      %v789 = vsel %vm739, %v711, 0
      %v792 = vsel %vm739, %v712, 0
      %v795 = vsel %vm739, %v713, 0
      %v798 = vsel %vm739, %v714, 0
      %v801 = vsel %vm739, %v715, 0
      %v804 = vsel %vm739, %v716, 0
      %v807 = vsel %vm739, %v717, 0
      %v810 = vsel %vm739, %v718, 0
      %v813 = vsel %vm739, %v719, 0
      %v816 = vsel %vm739, %v720, 0
      %v819 = vsel %vm739, %v721, 0
      %v822 = vsel %vm739, %v722, 0
      %v825 = vsel %vm739, %v723, 0
      %v828 = vsel %vm739, %v724, 0
      %v831 = vsel %vm739, %v725, 0
      %v834 = vsel %vm739, %v726, 0
      %836 = vmatpush.msra.mxu0 0.0
      %837 = vmatpush.msra.mxu0 0.0
      %838 = vmatpush.msra.mxu0 0.0
      %839 = vmatpush.msra.mxu0 0.0
      %840 = vmatpush.msra.mxu0 0.0
      %841 = vmatpush.msra.mxu0 0.0
      %842 = vmatpush.msra.mxu0 0.0
      %843 = vmatpush.msra.mxu0 0.0
      %844 = vmatpush.msra.mxu0 %v734
      %845 = vmatpush.msra.mxu0 %v733
      %846 = vmatpush.msra.mxu0 %v732
      %847 = vmatpush.msra.mxu0 %v731
      %848 = vmatpush.msra.mxu0 %v730
      %849 = vmatpush.msra.mxu0 %v729
      %850 = vmatpush.msra.mxu0 %v728
      %851 = vmatpush.msra.mxu0 %v727
      %852 = vmatmul.f32.gmra.mxu0 %v741
      %v853 = vpop.f32.mrf.mxu0
      %v854 = vadd.f32 %v737, %v853
      %855 = vmatmul.f32.gmra.mxu0 %v744
      %v856 = vpop.f32.mrf.mxu0
      %v857 = vadd.f32 %v737, %v856
      %858 = vmatmul.f32.gmra.mxu0 %v747
      %v859 = vpop.f32.mrf.mxu0
      %v860 = vadd.f32 %v737, %v859
      %861 = vmatmul.f32.gmra.mxu0 %v750
      %v862 = vpop.f32.mrf.mxu0
      %v863 = vadd.f32 %v737, %v862
      %864 = vmatmul.f32.gmra.mxu0 %v753
      %v865 = vpop.f32.mrf.mxu0
      %v866 = vadd.f32 %v737, %v865
      %867 = vmatmul.f32.gmra.mxu0 %v756
      %v868 = vpop.f32.mrf.mxu0
      %v869 = vadd.f32 %v737, %v868
      %870 = vmatmul.f32.gmra.mxu0 %v759
      %v871 = vpop.f32.mrf.mxu0
      %v872 = vadd.f32 %v737, %v871
      %873 = vmatmul.f32.gmra.mxu0 %v762
      %v874 = vpop.f32.mrf.mxu0
      %v875 = vadd.f32 %v737, %v874
      %876 = vmatmul.f32.gmra.mxu0 %v765
      %v877 = vpop.f32.mrf.mxu0
      %v878 = vadd.f32 %v737, %v877
      %879 = vmatmul.f32.gmra.mxu0 %v768
      %v880 = vpop.f32.mrf.mxu0
      %v881 = vadd.f32 %v737, %v880
      %882 = vmatmul.f32.gmra.mxu0 %v771
      %v883 = vpop.f32.mrf.mxu0
      %v884 = vadd.f32 %v737, %v883
      %885 = vmatmul.f32.gmra.mxu0 %v774
      %v886 = vpop.f32.mrf.mxu0
      %v887 = vadd.f32 %v737, %v886
      %888 = vmatmul.f32.gmra.mxu0 %v777
      %v889 = vpop.f32.mrf.mxu0
      %v890 = vadd.f32 %v737, %v889
      %891 = vmatmul.f32.gmra.mxu0 %v780
      %v892 = vpop.f32.mrf.mxu0
      %v893 = vadd.f32 %v737, %v892
      %894 = vmatmul.f32.gmra.mxu0 %v783
      %v895 = vpop.f32.mrf.mxu0
      %v896 = vadd.f32 %v737, %v895
      %897 = vmatmul.f32.gmra.mxu0 %v786
      %v898 = vpop.f32.mrf.mxu0
      %v899 = vadd.f32 %v737, %v898
      %900 = vmatmul.f32.gmra.mxu0 %v789
      %v901 = vpop.f32.mrf.mxu0
      %v902 = vadd.f32 %v737, %v901
      %903 = vmatmul.f32.gmra.mxu0 %v792
      %v904 = vpop.f32.mrf.mxu0
      %v905 = vadd.f32 %v737, %v904
      %906 = vmatmul.f32.gmra.mxu0 %v795
      %v907 = vpop.f32.mrf.mxu0
      %v908 = vadd.f32 %v737, %v907
      %909 = vmatmul.f32.gmra.mxu0 %v798
      %v910 = vpop.f32.mrf.mxu0
      %v911 = vadd.f32 %v737, %v910
      %912 = vmatmul.f32.gmra.mxu0 %v801
      %v913 = vpop.f32.mrf.mxu0
      %v914 = vadd.f32 %v737, %v913
      %915 = vmatmul.f32.gmra.mxu0 %v804
      %v916 = vpop.f32.mrf.mxu0
      %v917 = vadd.f32 %v737, %v916
      %918 = vmatmul.f32.gmra.mxu0 %v807
      %v919 = vpop.f32.mrf.mxu0
      %v920 = vadd.f32 %v737, %v919
      %921 = vmatmul.f32.gmra.mxu0 %v810
      %v922 = vpop.f32.mrf.mxu0
      %v923 = vadd.f32 %v737, %v922
      %924 = vmatmul.f32.gmra.mxu0 %v813
      %v925 = vpop.f32.mrf.mxu0
      %v926 = vadd.f32 %v737, %v925
      %927 = vmatmul.f32.gmra.mxu0 %v816
      %v928 = vpop.f32.mrf.mxu0
      %v929 = vadd.f32 %v737, %v928
      %930 = vmatmul.f32.gmra.mxu0 %v819
      %v931 = vpop.f32.mrf.mxu0
      %v932 = vadd.f32 %v737, %v931
      %933 = vmatmul.f32.gmra.mxu0 %v822
      %v934 = vpop.f32.mrf.mxu0
      %v935 = vadd.f32 %v737, %v934
      %936 = vmatmul.f32.gmra.mxu0 %v825
      %v937 = vpop.f32.mrf.mxu0
      %v938 = vadd.f32 %v737, %v937
      %939 = vmatmul.f32.gmra.mxu0 %v828
      %v940 = vpop.f32.mrf.mxu0
      %v941 = vadd.f32 %v737, %v940
      %942 = vmatmul.f32.gmra.mxu0 %v831
      %v943 = vpop.f32.mrf.mxu0
      %v944 = vadd.f32 %v737, %v943
      %945 = vmatmul.f32.gmra.mxu0 %v834
      %v946 = vpop.f32.mrf.mxu0
      %v947 = vadd.f32 %v737, %v946
      %948 = vdwg.mxu0
      %v949 = vtanh.pop %v854
      %v950 = vtanh.pop %v857
      %v951 = vtanh.pop %v860
      %v952 = vtanh.pop %v863
      %v953 = vtanh.pop %v866
      %v954 = vtanh.pop %v869
      %v955 = vtanh.pop %v872
      %v956 = vtanh.pop %v875
      %v957 = vtanh.pop %v878
      %v958 = vtanh.pop %v881
      %v959 = vtanh.pop %v884
      %v960 = vtanh.pop %v887
      %v961 = vtanh.pop %v890
      %v962 = vtanh.pop %v893
      %v963 = vtanh.pop %v896
      %v964 = vtanh.pop %v899
      %v965 = vtanh.pop %v902
      %v966 = vtanh.pop %v905
      %v967 = vtanh.pop %v908
      %v968 = vtanh.pop %v911
      %v969 = vtanh.pop %v914
      %v970 = vtanh.pop %v917
      %v971 = vtanh.pop %v920
      %v972 = vtanh.pop %v923
      %v973 = vtanh.pop %v926
      %v974 = vtanh.pop %v929
      %v975 = vtanh.pop %v932
      %v976 = vtanh.pop %v935
      %v977 = vtanh.pop %v938
      %v978 = vtanh.pop %v941
      %v979 = vtanh.pop %v944
      %v980 = vtanh.pop %v947
      %v981 = vld [vmem:[%s5] sm:$0xff]
      %v982 = vld [vmem:[%s5 + $0x8] sm:$0xff]
      %v983 = vld [vmem:[%s5 + $0x10] sm:$0xff]
      %v984 = vld [vmem:[%s5 + $0x18] sm:$0xff]
      %v985 = vld [vmem:[%s5 + $0x20] sm:$0xff]
      %v986 = vld [vmem:[%s5 + $0x28] sm:$0xff]
      %v987 = vld [vmem:[%s5 + $0x30] sm:$0xff]
      %v988 = vld [vmem:[%s5 + $0x38] sm:$0xff]
      %v989 = vld [vmem:[%s6] sm:$0x1]
      %v991 = vperm.slane %v989, 0
      %v994 = vsel %vm739, %v949, 0
      %v997 = vsel %vm739, %v950, 0
      %v1000 = vsel %vm739, %v951, 0
      %v1003 = vsel %vm739, %v952, 0
      %v1006 = vsel %vm739, %v953, 0
      %v1009 = vsel %vm739, %v954, 0
      %v1012 = vsel %vm739, %v955, 0
      %v1015 = vsel %vm739, %v956, 0
      %v1018 = vsel %vm739, %v957, 0
      %v1021 = vsel %vm739, %v958, 0
      %v1024 = vsel %vm739, %v959, 0
      %v1027 = vsel %vm739, %v960, 0
      %v1030 = vsel %vm739, %v961, 0
      %v1033 = vsel %vm739, %v962, 0
      %v1036 = vsel %vm739, %v963, 0
      %v1039 = vsel %vm739, %v964, 0
      %v1042 = vsel %vm739, %v965, 0
      %v1045 = vsel %vm739, %v966, 0
      %v1048 = vsel %vm739, %v967, 0
      %v1051 = vsel %vm739, %v968, 0
      %v1054 = vsel %vm739, %v969, 0
      %v1057 = vsel %vm739, %v970, 0
      %v1060 = vsel %vm739, %v971, 0
      %v1063 = vsel %vm739, %v972, 0
      %v1066 = vsel %vm739, %v973, 0
      %v1069 = vsel %vm739, %v974, 0
      %v1072 = vsel %vm739, %v975, 0
      %v1075 = vsel %vm739, %v976, 0
      %v1078 = vsel %vm739, %v977, 0
      %v1081 = vsel %vm739, %v978, 0
      %v1084 = vsel %vm739, %v979, 0
      %v1087 = vsel %vm739, %v980, 0
      %1089 = vmatpush.msra.mxu0 0.0
      %1090 = vmatpush.msra.mxu0 0.0
      %1091 = vmatpush.msra.mxu0 0.0
      %1092 = vmatpush.msra.mxu0 0.0
      %1093 = vmatpush.msra.mxu0 0.0
      %1094 = vmatpush.msra.mxu0 0.0
      %1095 = vmatpush.msra.mxu0 0.0
      %1096 = vmatpush.msra.mxu0 0.0
      %1097 = vmatpush.msra.mxu0 %v988
      %1098 = vmatpush.msra.mxu0 %v987
      %1099 = vmatpush.msra.mxu0 %v986
      %1100 = vmatpush.msra.mxu0 %v985
      %1101 = vmatpush.msra.mxu0 %v984
      %1102 = vmatpush.msra.mxu0 %v983
      %1103 = vmatpush.msra.mxu0 %v982
      %1104 = vmatpush.msra.mxu0 %v981
      %1105 = vmatmul.f32.gmra.mxu0 %v994
      %v1106 = vpop.f32.mrf.mxu0
      %v1107 = vadd.f32 %v991, %v1106
      %1108 = vmatmul.f32.gmra.mxu0 %v997
      %v1109 = vpop.f32.mrf.mxu0
      %v1110 = vadd.f32 %v991, %v1109
      %1111 = vmatmul.f32.gmra.mxu0 %v1000
      %v1112 = vpop.f32.mrf.mxu0
      %v1113 = vadd.f32 %v991, %v1112
      %1114 = vmatmul.f32.gmra.mxu0 %v1003
      %v1115 = vpop.f32.mrf.mxu0
      %v1116 = vadd.f32 %v991, %v1115
      %1117 = vmatmul.f32.gmra.mxu0 %v1006
      %v1118 = vpop.f32.mrf.mxu0
      %v1119 = vadd.f32 %v991, %v1118
      %1120 = vmatmul.f32.gmra.mxu0 %v1009
      %v1121 = vpop.f32.mrf.mxu0
      %v1122 = vadd.f32 %v991, %v1121
      %1123 = vmatmul.f32.gmra.mxu0 %v1012
      %v1124 = vpop.f32.mrf.mxu0
      %v1125 = vadd.f32 %v991, %v1124
      %1126 = vmatmul.f32.gmra.mxu0 %v1015
      %v1127 = vpop.f32.mrf.mxu0
      %v1128 = vadd.f32 %v991, %v1127
      %1129 = vmatmul.f32.gmra.mxu0 %v1018
      %v1130 = vpop.f32.mrf.mxu0
      %v1131 = vadd.f32 %v991, %v1130
      %1132 = vmatmul.f32.gmra.mxu0 %v1021
      %v1133 = vpop.f32.mrf.mxu0
      %v1134 = vadd.f32 %v991, %v1133
      %1135 = vmatmul.f32.gmra.mxu0 %v1024
      %v1136 = vpop.f32.mrf.mxu0
      %v1137 = vadd.f32 %v991, %v1136
      %1138 = vmatmul.f32.gmra.mxu0 %v1027
      %v1139 = vpop.f32.mrf.mxu0
      %v1140 = vadd.f32 %v991, %v1139
      %1141 = vmatmul.f32.gmra.mxu0 %v1030
      %v1142 = vpop.f32.mrf.mxu0
      %v1143 = vadd.f32 %v991, %v1142
      %1144 = vmatmul.f32.gmra.mxu0 %v1033
      %v1145 = vpop.f32.mrf.mxu0
      %v1146 = vadd.f32 %v991, %v1145
      %1147 = vmatmul.f32.gmra.mxu0 %v1036
      %v1148 = vpop.f32.mrf.mxu0
      %v1149 = vadd.f32 %v991, %v1148
      %1150 = vmatmul.f32.gmra.mxu0 %v1039
      %v1151 = vpop.f32.mrf.mxu0
      %v1152 = vadd.f32 %v991, %v1151
      %1153 = vmatmul.f32.gmra.mxu0 %v1042
      %v1154 = vpop.f32.mrf.mxu0
      %v1155 = vadd.f32 %v991, %v1154
      %1156 = vmatmul.f32.gmra.mxu0 %v1045
      %v1157 = vpop.f32.mrf.mxu0
      %v1158 = vadd.f32 %v991, %v1157
      %1159 = vmatmul.f32.gmra.mxu0 %v1048
      %v1160 = vpop.f32.mrf.mxu0
      %v1161 = vadd.f32 %v991, %v1160
      %1162 = vmatmul.f32.gmra.mxu0 %v1051
      %v1163 = vpop.f32.mrf.mxu0
      %v1164 = vadd.f32 %v991, %v1163
      %1165 = vmatmul.f32.gmra.mxu0 %v1054
      %v1166 = vpop.f32.mrf.mxu0
      %v1167 = vadd.f32 %v991, %v1166
      %1168 = vmatmul.f32.gmra.mxu0 %v1057
      %v1169 = vpop.f32.mrf.mxu0
      %v1170 = vadd.f32 %v991, %v1169
      %1171 = vmatmul.f32.gmra.mxu0 %v1060
      %v1172 = vpop.f32.mrf.mxu0
      %v1173 = vadd.f32 %v991, %v1172
      %1174 = vmatmul.f32.gmra.mxu0 %v1063
      %v1175 = vpop.f32.mrf.mxu0
      %v1176 = vadd.f32 %v991, %v1175
      %1177 = vmatmul.f32.gmra.mxu0 %v1066
      %v1178 = vpop.f32.mrf.mxu0
      %v1179 = vadd.f32 %v991, %v1178
      %1180 = vmatmul.f32.gmra.mxu0 %v1069
      %v1181 = vpop.f32.mrf.mxu0
      %v1182 = vadd.f32 %v991, %v1181
      %1183 = vmatmul.f32.gmra.mxu0 %v1072
      %v1184 = vpop.f32.mrf.mxu0
      %v1185 = vadd.f32 %v991, %v1184
      %1186 = vmatmul.f32.gmra.mxu0 %v1075
      %v1187 = vpop.f32.mrf.mxu0
      %v1188 = vadd.f32 %v991, %v1187
      %1189 = vmatmul.f32.gmra.mxu0 %v1078
      %v1190 = vpop.f32.mrf.mxu0
      %v1191 = vadd.f32 %v991, %v1190
      %1192 = vmatmul.f32.gmra.mxu0 %v1081
      %v1193 = vpop.f32.mrf.mxu0
      %v1194 = vadd.f32 %v991, %v1193
      %1195 = vmatmul.f32.gmra.mxu0 %v1084
      %v1196 = vpop.f32.mrf.mxu0
      %v1197 = vadd.f32 %v991, %v1196
      %1198 = vmatmul.f32.gmra.mxu0 %v1087
      %v1199 = vpop.f32.mrf.mxu0
      %v1200 = vadd.f32 %v991, %v1199
      %1201 = vdwg.mxu0
      %v1202 = vtanh.pop %v1107
      %v1203 = vtanh.pop %v1110
      %v1204 = vtanh.pop %v1113
      %v1205 = vtanh.pop %v1116
      %v1206 = vtanh.pop %v1119
      %v1207 = vtanh.pop %v1122
      %v1208 = vtanh.pop %v1125
      %v1209 = vtanh.pop %v1128
      %v1210 = vtanh.pop %v1131
      %v1211 = vtanh.pop %v1134
      %v1212 = vtanh.pop %v1137
      %v1213 = vtanh.pop %v1140
      %v1214 = vtanh.pop %v1143
      %v1215 = vtanh.pop %v1146
      %v1216 = vtanh.pop %v1149
      %v1217 = vtanh.pop %v1152
      %v1218 = vtanh.pop %v1155
      %v1219 = vtanh.pop %v1158
      %v1220 = vtanh.pop %v1161
      %v1221 = vtanh.pop %v1164
      %v1222 = vtanh.pop %v1167
      %v1223 = vtanh.pop %v1170
      %v1224 = vtanh.pop %v1173
      %v1225 = vtanh.pop %v1176
      %v1226 = vtanh.pop %v1179
      %v1227 = vtanh.pop %v1182
      %v1228 = vtanh.pop %v1185
      %v1229 = vtanh.pop %v1188
      %v1230 = vtanh.pop %v1191
      %v1231 = vtanh.pop %v1194
      %v1232 = vtanh.pop %v1197
      %v1233 = vtanh.pop %v1200
      %v1234 = vld [vmem:[%s7] sm:$0xff]
      %v1235 = vld [vmem:[%s7 + $0x8] sm:$0xff]
      %v1236 = vld [vmem:[%s7 + $0x10] sm:$0xff]
      %v1237 = vld [vmem:[%s7 + $0x18] sm:$0xff]
      %v1238 = vld [vmem:[%s7 + $0x20] sm:$0xff]
      %v1239 = vld [vmem:[%s7 + $0x28] sm:$0xff]
      %v1240 = vld [vmem:[%s7 + $0x30] sm:$0xff]
      %v1241 = vld [vmem:[%s7 + $0x38] sm:$0xff]
      %v1242 = vld [vmem:[%s8] sm:$0x1]
      %v1244 = vperm.slane %v1242, 0
      %v1247 = vsel %vm739, %v1202, 0
      %v1250 = vsel %vm739, %v1203, 0
      %v1253 = vsel %vm739, %v1204, 0
      %v1256 = vsel %vm739, %v1205, 0
      %v1259 = vsel %vm739, %v1206, 0
      %v1262 = vsel %vm739, %v1207, 0
      %v1265 = vsel %vm739, %v1208, 0
      %v1268 = vsel %vm739, %v1209, 0
      %v1271 = vsel %vm739, %v1210, 0
      %v1274 = vsel %vm739, %v1211, 0
      %v1277 = vsel %vm739, %v1212, 0
      %v1280 = vsel %vm739, %v1213, 0
      %v1283 = vsel %vm739, %v1214, 0
      %v1286 = vsel %vm739, %v1215, 0
      %v1289 = vsel %vm739, %v1216, 0
      %v1292 = vsel %vm739, %v1217, 0
      %v1295 = vsel %vm739, %v1218, 0
      %v1298 = vsel %vm739, %v1219, 0
      %v1301 = vsel %vm739, %v1220, 0
      %v1304 = vsel %vm739, %v1221, 0
      %v1307 = vsel %vm739, %v1222, 0
      %v1310 = vsel %vm739, %v1223, 0
      %v1313 = vsel %vm739, %v1224, 0
      %v1316 = vsel %vm739, %v1225, 0
      %v1319 = vsel %vm739, %v1226, 0
      %v1322 = vsel %vm739, %v1227, 0
      %v1325 = vsel %vm739, %v1228, 0
      %v1328 = vsel %vm739, %v1229, 0
      %v1331 = vsel %vm739, %v1230, 0
      %v1334 = vsel %vm739, %v1231, 0
      %v1337 = vsel %vm739, %v1232, 0
      %v1340 = vsel %vm739, %v1233, 0
      %1342 = vmatpush.msra.mxu0 0.0
      %1343 = vmatpush.msra.mxu0 0.0
      %1344 = vmatpush.msra.mxu0 0.0
      %1345 = vmatpush.msra.mxu0 0.0
      %1346 = vmatpush.msra.mxu0 0.0
      %1347 = vmatpush.msra.mxu0 0.0
      %1348 = vmatpush.msra.mxu0 0.0
      %1349 = vmatpush.msra.mxu0 0.0
      %1350 = vmatpush.msra.mxu0 %v1241
      %1351 = vmatpush.msra.mxu0 %v1240
      %1352 = vmatpush.msra.mxu0 %v1239
      %1353 = vmatpush.msra.mxu0 %v1238
      %1354 = vmatpush.msra.mxu0 %v1237
      %1355 = vmatpush.msra.mxu0 %v1236
      %1356 = vmatpush.msra.mxu0 %v1235
      %1357 = vmatpush.msra.mxu0 %v1234
      %1358 = vmatmul.f32.gmra.mxu0 %v1247
      %v1359 = vpop.f32.mrf.mxu0
      %v1360 = vadd.f32 %v1244, %v1359
      %1361 = vmatmul.f32.gmra.mxu0 %v1250
      %v1362 = vpop.f32.mrf.mxu0
      %v1363 = vadd.f32 %v1244, %v1362
      %1364 = vmatmul.f32.gmra.mxu0 %v1253
      %v1365 = vpop.f32.mrf.mxu0
      %v1366 = vadd.f32 %v1244, %v1365
      %1367 = vmatmul.f32.gmra.mxu0 %v1256
      %v1368 = vpop.f32.mrf.mxu0
      %v1369 = vadd.f32 %v1244, %v1368
      %1370 = vmatmul.f32.gmra.mxu0 %v1259
      %v1371 = vpop.f32.mrf.mxu0
      %v1372 = vadd.f32 %v1244, %v1371
      %1373 = vmatmul.f32.gmra.mxu0 %v1262
      %v1374 = vpop.f32.mrf.mxu0
      %v1375 = vadd.f32 %v1244, %v1374
      %1376 = vmatmul.f32.gmra.mxu0 %v1265
      %v1377 = vpop.f32.mrf.mxu0
      %v1378 = vadd.f32 %v1244, %v1377
      %1379 = vmatmul.f32.gmra.mxu0 %v1268
      %v1380 = vpop.f32.mrf.mxu0
      %v1381 = vadd.f32 %v1244, %v1380
      %1382 = vmatmul.f32.gmra.mxu0 %v1271
      %v1383 = vpop.f32.mrf.mxu0
      %v1384 = vadd.f32 %v1244, %v1383
      %1385 = vmatmul.f32.gmra.mxu0 %v1274
      %v1386 = vpop.f32.mrf.mxu0
      %v1387 = vadd.f32 %v1244, %v1386
      %1388 = vmatmul.f32.gmra.mxu0 %v1277
      %v1389 = vpop.f32.mrf.mxu0
      %v1390 = vadd.f32 %v1244, %v1389
      %1391 = vmatmul.f32.gmra.mxu0 %v1280
      %v1392 = vpop.f32.mrf.mxu0
      %v1393 = vadd.f32 %v1244, %v1392
      %1394 = vmatmul.f32.gmra.mxu0 %v1283
      %v1395 = vpop.f32.mrf.mxu0
      %v1396 = vadd.f32 %v1244, %v1395
      %1397 = vmatmul.f32.gmra.mxu0 %v1286
      %v1398 = vpop.f32.mrf.mxu0
      %v1399 = vadd.f32 %v1244, %v1398
      %1400 = vmatmul.f32.gmra.mxu0 %v1289
      %v1401 = vpop.f32.mrf.mxu0
      %v1402 = vadd.f32 %v1244, %v1401
      %1403 = vmatmul.f32.gmra.mxu0 %v1292
      %v1404 = vpop.f32.mrf.mxu0
      %v1405 = vadd.f32 %v1244, %v1404
      %1406 = vmatmul.f32.gmra.mxu0 %v1295
      %v1407 = vpop.f32.mrf.mxu0
      %v1408 = vadd.f32 %v1244, %v1407
      %1409 = vmatmul.f32.gmra.mxu0 %v1298
      %v1410 = vpop.f32.mrf.mxu0
      %v1411 = vadd.f32 %v1244, %v1410
      %1412 = vmatmul.f32.gmra.mxu0 %v1301
      %v1413 = vpop.f32.mrf.mxu0
      %v1414 = vadd.f32 %v1244, %v1413
      %1415 = vmatmul.f32.gmra.mxu0 %v1304
      %v1416 = vpop.f32.mrf.mxu0
      %v1417 = vadd.f32 %v1244, %v1416
      %1418 = vmatmul.f32.gmra.mxu0 %v1307
      %v1419 = vpop.f32.mrf.mxu0
      %v1420 = vadd.f32 %v1244, %v1419
      %1421 = vmatmul.f32.gmra.mxu0 %v1310
      %v1422 = vpop.f32.mrf.mxu0
      %v1423 = vadd.f32 %v1244, %v1422
      %1424 = vmatmul.f32.gmra.mxu0 %v1313
      %v1425 = vpop.f32.mrf.mxu0
      %v1426 = vadd.f32 %v1244, %v1425
      %1427 = vmatmul.f32.gmra.mxu0 %v1316
      %v1428 = vpop.f32.mrf.mxu0
      %v1429 = vadd.f32 %v1244, %v1428
      %1430 = vmatmul.f32.gmra.mxu0 %v1319
      %v1431 = vpop.f32.mrf.mxu0
      %v1432 = vadd.f32 %v1244, %v1431
      %1433 = vmatmul.f32.gmra.mxu0 %v1322
      %v1434 = vpop.f32.mrf.mxu0
      %v1435 = vadd.f32 %v1244, %v1434
      %1436 = vmatmul.f32.gmra.mxu0 %v1325
      %v1437 = vpop.f32.mrf.mxu0
      %v1438 = vadd.f32 %v1244, %v1437
      %1439 = vmatmul.f32.gmra.mxu0 %v1328
      %v1440 = vpop.f32.mrf.mxu0
      %v1441 = vadd.f32 %v1244, %v1440
      %1442 = vmatmul.f32.gmra.mxu0 %v1331
      %v1443 = vpop.f32.mrf.mxu0
      %v1444 = vadd.f32 %v1244, %v1443
      %1445 = vmatmul.f32.gmra.mxu0 %v1334
      %v1446 = vpop.f32.mrf.mxu0
      %v1447 = vadd.f32 %v1244, %v1446
      %1448 = vmatmul.f32.gmra.mxu0 %v1337
      %v1449 = vpop.f32.mrf.mxu0
      %v1450 = vadd.f32 %v1244, %v1449
      %1451 = vmatmul.f32.gmra.mxu0 %v1340
      %v1452 = vpop.f32.mrf.mxu0
      %v1453 = vadd.f32 %v1244, %v1452
      %1454 = vdwg.mxu0
      %v1455 = vtanh.pop %v1360
      %v1456 = vtanh.pop %v1363
      %v1457 = vtanh.pop %v1366
      %v1458 = vtanh.pop %v1369
      %v1459 = vtanh.pop %v1372
      %v1460 = vtanh.pop %v1375
      %v1461 = vtanh.pop %v1378
      %v1462 = vtanh.pop %v1381
      %v1463 = vtanh.pop %v1384
      %v1464 = vtanh.pop %v1387
      %v1465 = vtanh.pop %v1390
      %v1466 = vtanh.pop %v1393
      %v1467 = vtanh.pop %v1396
      %v1468 = vtanh.pop %v1399
      %v1469 = vtanh.pop %v1402
      %v1470 = vtanh.pop %v1405
      %v1471 = vtanh.pop %v1408
      %v1472 = vtanh.pop %v1411
      %v1473 = vtanh.pop %v1414
      %v1474 = vtanh.pop %v1417
      %v1475 = vtanh.pop %v1420
      %v1476 = vtanh.pop %v1423
      %v1477 = vtanh.pop %v1426
      %v1478 = vtanh.pop %v1429
      %v1479 = vtanh.pop %v1432
      %v1480 = vtanh.pop %v1435
      %v1481 = vtanh.pop %v1438
      %v1482 = vtanh.pop %v1441
      %v1483 = vtanh.pop %v1444
      %v1484 = vtanh.pop %v1447
      %v1485 = vtanh.pop %v1450
      %v1486 = vtanh.pop %v1453
      %v1487 = vld [vmem:[%s9] sm:$0xff]
      %v1488 = vld [vmem:[%s9 + $0x8] sm:$0xff]
      %v1489 = vld [vmem:[%s9 + $0x10] sm:$0xff]
      %v1490 = vld [vmem:[%s9 + $0x18] sm:$0xff]
      %v1491 = vld [vmem:[%s9 + $0x20] sm:$0xff]
      %v1492 = vld [vmem:[%s9 + $0x28] sm:$0xff]
      %v1493 = vld [vmem:[%s9 + $0x30] sm:$0xff]
      %v1494 = vld [vmem:[%s9 + $0x38] sm:$0xff]
      %v1495 = vld [vmem:[%s10] sm:$0x1]
      %v1497 = vperm.slane %v1495, 0
      %v1500 = vsel %vm739, %v1455, 0
      %v1503 = vsel %vm739, %v1456, 0
      %v1506 = vsel %vm739, %v1457, 0
      %v1509 = vsel %vm739, %v1458, 0
      %v1512 = vsel %vm739, %v1459, 0
      %v1515 = vsel %vm739, %v1460, 0
      %v1518 = vsel %vm739, %v1461, 0
      %v1521 = vsel %vm739, %v1462, 0
      %v1524 = vsel %vm739, %v1463, 0
      %v1527 = vsel %vm739, %v1464, 0
      %v1530 = vsel %vm739, %v1465, 0
      %v1533 = vsel %vm739, %v1466, 0
      %v1536 = vsel %vm739, %v1467, 0
      %v1539 = vsel %vm739, %v1468, 0
      %v1542 = vsel %vm739, %v1469, 0
      %v1545 = vsel %vm739, %v1470, 0
      %v1548 = vsel %vm739, %v1471, 0
      %v1551 = vsel %vm739, %v1472, 0
      %v1554 = vsel %vm739, %v1473, 0
      %v1557 = vsel %vm739, %v1474, 0
      %v1560 = vsel %vm739, %v1475, 0
      %v1563 = vsel %vm739, %v1476, 0
      %v1566 = vsel %vm739, %v1477, 0
      %v1569 = vsel %vm739, %v1478, 0
      %v1572 = vsel %vm739, %v1479, 0
      %v1575 = vsel %vm739, %v1480, 0
      %v1578 = vsel %vm739, %v1481, 0
      %v1581 = vsel %vm739, %v1482, 0
      %v1584 = vsel %vm739, %v1483, 0
      %v1587 = vsel %vm739, %v1484, 0
      %v1590 = vsel %vm739, %v1485, 0
      %v1593 = vsel %vm739, %v1486, 0
      %1595 = vmatpush.msra.mxu0 0.0
      %1596 = vmatpush.msra.mxu0 0.0
      %1597 = vmatpush.msra.mxu0 0.0
      %1598 = vmatpush.msra.mxu0 0.0
      %1599 = vmatpush.msra.mxu0 0.0
      %1600 = vmatpush.msra.mxu0 0.0
      %1601 = vmatpush.msra.mxu0 0.0
      %1602 = vmatpush.msra.mxu0 0.0
      %1603 = vmatpush.msra.mxu0 %v1494
      %1604 = vmatpush.msra.mxu0 %v1493
      %1605 = vmatpush.msra.mxu0 %v1492
      %1606 = vmatpush.msra.mxu0 %v1491
      %1607 = vmatpush.msra.mxu0 %v1490
      %1608 = vmatpush.msra.mxu0 %v1489
      %1609 = vmatpush.msra.mxu0 %v1488
      %1610 = vmatpush.msra.mxu0 %v1487
      %1611 = vmatmul.f32.gmra.mxu0 %v1500
      %v1612 = vpop.f32.mrf.mxu0
      %v1613 = vadd.f32 %v1497, %v1612
      %1614 = vmatmul.f32.gmra.mxu0 %v1503
      %v1615 = vpop.f32.mrf.mxu0
      %v1616 = vadd.f32 %v1497, %v1615
      %1617 = vmatmul.f32.gmra.mxu0 %v1506
      %v1618 = vpop.f32.mrf.mxu0
      %v1619 = vadd.f32 %v1497, %v1618
      %1620 = vmatmul.f32.gmra.mxu0 %v1509
      %v1621 = vpop.f32.mrf.mxu0
      %v1622 = vadd.f32 %v1497, %v1621
      %1623 = vmatmul.f32.gmra.mxu0 %v1512
      %v1624 = vpop.f32.mrf.mxu0
      %v1625 = vadd.f32 %v1497, %v1624
      %1626 = vmatmul.f32.gmra.mxu0 %v1515
      %v1627 = vpop.f32.mrf.mxu0
      %v1628 = vadd.f32 %v1497, %v1627
      %1629 = vmatmul.f32.gmra.mxu0 %v1518
      %v1630 = vpop.f32.mrf.mxu0
      %v1631 = vadd.f32 %v1497, %v1630
      %1632 = vmatmul.f32.gmra.mxu0 %v1521
      %v1633 = vpop.f32.mrf.mxu0
      %v1634 = vadd.f32 %v1497, %v1633
      %1635 = vmatmul.f32.gmra.mxu0 %v1524
      %v1636 = vpop.f32.mrf.mxu0
      %v1637 = vadd.f32 %v1497, %v1636
      %1638 = vmatmul.f32.gmra.mxu0 %v1527
      %v1639 = vpop.f32.mrf.mxu0
      %v1640 = vadd.f32 %v1497, %v1639
      %1641 = vmatmul.f32.gmra.mxu0 %v1530
      %v1642 = vpop.f32.mrf.mxu0
      %v1643 = vadd.f32 %v1497, %v1642
      %1644 = vmatmul.f32.gmra.mxu0 %v1533
      %v1645 = vpop.f32.mrf.mxu0
      %v1646 = vadd.f32 %v1497, %v1645
      %1647 = vmatmul.f32.gmra.mxu0 %v1536
      %v1648 = vpop.f32.mrf.mxu0
      %v1649 = vadd.f32 %v1497, %v1648
      %1650 = vmatmul.f32.gmra.mxu0 %v1539
      %v1651 = vpop.f32.mrf.mxu0
      %v1652 = vadd.f32 %v1497, %v1651
      %1653 = vmatmul.f32.gmra.mxu0 %v1542
      %v1654 = vpop.f32.mrf.mxu0
      %v1655 = vadd.f32 %v1497, %v1654
      %1656 = vmatmul.f32.gmra.mxu0 %v1545
      %v1657 = vpop.f32.mrf.mxu0
      %v1658 = vadd.f32 %v1497, %v1657
      %1659 = vmatmul.f32.gmra.mxu0 %v1548
      %v1660 = vpop.f32.mrf.mxu0
      %v1661 = vadd.f32 %v1497, %v1660
      %1662 = vmatmul.f32.gmra.mxu0 %v1551
      %v1663 = vpop.f32.mrf.mxu0
      %v1664 = vadd.f32 %v1497, %v1663
      %1665 = vmatmul.f32.gmra.mxu0 %v1554
      %v1666 = vpop.f32.mrf.mxu0
      %v1667 = vadd.f32 %v1497, %v1666
      %1668 = vmatmul.f32.gmra.mxu0 %v1557
      %v1669 = vpop.f32.mrf.mxu0
      %v1670 = vadd.f32 %v1497, %v1669
      %1671 = vmatmul.f32.gmra.mxu0 %v1560
      %v1672 = vpop.f32.mrf.mxu0
      %v1673 = vadd.f32 %v1497, %v1672
      %1674 = vmatmul.f32.gmra.mxu0 %v1563
      %v1675 = vpop.f32.mrf.mxu0
      %v1676 = vadd.f32 %v1497, %v1675
      %1677 = vmatmul.f32.gmra.mxu0 %v1566
      %v1678 = vpop.f32.mrf.mxu0
      %v1679 = vadd.f32 %v1497, %v1678
      %1680 = vmatmul.f32.gmra.mxu0 %v1569
      %v1681 = vpop.f32.mrf.mxu0
      %v1682 = vadd.f32 %v1497, %v1681
      %1683 = vmatmul.f32.gmra.mxu0 %v1572
      %v1684 = vpop.f32.mrf.mxu0
      %v1685 = vadd.f32 %v1497, %v1684
      %1686 = vmatmul.f32.gmra.mxu0 %v1575
      %v1687 = vpop.f32.mrf.mxu0
      %v1688 = vadd.f32 %v1497, %v1687
      %1689 = vmatmul.f32.gmra.mxu0 %v1578
      %v1690 = vpop.f32.mrf.mxu0
      %v1691 = vadd.f32 %v1497, %v1690
      %1692 = vmatmul.f32.gmra.mxu0 %v1581
      %v1693 = vpop.f32.mrf.mxu0
      %v1694 = vadd.f32 %v1497, %v1693
      %1695 = vmatmul.f32.gmra.mxu0 %v1584
      %v1696 = vpop.f32.mrf.mxu0
      %v1697 = vadd.f32 %v1497, %v1696
      %1698 = vmatmul.f32.gmra.mxu0 %v1587
      %v1699 = vpop.f32.mrf.mxu0
      %v1700 = vadd.f32 %v1497, %v1699
      %1701 = vmatmul.f32.gmra.mxu0 %v1590
      %v1702 = vpop.f32.mrf.mxu0
      %v1703 = vadd.f32 %v1497, %v1702
      %1704 = vmatmul.f32.gmra.mxu0 %v1593
      %v1705 = vpop.f32.mrf.mxu0
      %v1706 = vadd.f32 %v1497, %v1705
      %1707 = vdwg.mxu0
      %v1708 = vtanh.pop %v1613
      %v1709 = vtanh.pop %v1616
      %v1710 = vtanh.pop %v1619
      %v1711 = vtanh.pop %v1622
      %v1712 = vtanh.pop %v1625
      %v1713 = vtanh.pop %v1628
      %v1714 = vtanh.pop %v1631
      %v1715 = vtanh.pop %v1634
      %v1716 = vtanh.pop %v1637
      %v1717 = vtanh.pop %v1640
      %v1718 = vtanh.pop %v1643
      %v1719 = vtanh.pop %v1646
      %v1720 = vtanh.pop %v1649
      %v1721 = vtanh.pop %v1652
      %v1722 = vtanh.pop %v1655
      %v1723 = vtanh.pop %v1658
      %v1724 = vtanh.pop %v1661
      %v1725 = vtanh.pop %v1664
      %v1726 = vtanh.pop %v1667
      %v1727 = vtanh.pop %v1670
      %v1728 = vtanh.pop %v1673
      %v1729 = vtanh.pop %v1676
      %v1730 = vtanh.pop %v1679
      %v1731 = vtanh.pop %v1682
      %v1732 = vtanh.pop %v1685
      %v1733 = vtanh.pop %v1688
      %v1734 = vtanh.pop %v1691
      %v1735 = vtanh.pop %v1694
      %v1736 = vtanh.pop %v1697
      %v1737 = vtanh.pop %v1700
      %v1738 = vtanh.pop %v1703
      %v1739 = vtanh.pop %v1706
      %v1740 = vld [vmem:[%s11] sm:$0xff]
      %v1741 = vld [vmem:[%s11 + $0x8] sm:$0xff]
      %v1742 = vld [vmem:[%s11 + $0x10] sm:$0xff]
      %v1743 = vld [vmem:[%s11 + $0x18] sm:$0xff]
      %v1744 = vld [vmem:[%s11 + $0x20] sm:$0xff]
      %v1745 = vld [vmem:[%s11 + $0x28] sm:$0xff]
      %v1746 = vld [vmem:[%s11 + $0x30] sm:$0xff]
      %v1747 = vld [vmem:[%s11 + $0x38] sm:$0xff]
      %v1748 = vld [vmem:[%s12] sm:$0x1]
      %v1750 = vperm.slane %v1748, 0
      %v1753 = vsel %vm739, %v1708, 0
      %v1756 = vsel %vm739, %v1709, 0
      %v1759 = vsel %vm739, %v1710, 0
      %v1762 = vsel %vm739, %v1711, 0
      %v1765 = vsel %vm739, %v1712, 0
      %v1768 = vsel %vm739, %v1713, 0
      %v1771 = vsel %vm739, %v1714, 0
      %v1774 = vsel %vm739, %v1715, 0
      %v1777 = vsel %vm739, %v1716, 0
      %v1780 = vsel %vm739, %v1717, 0
      %v1783 = vsel %vm739, %v1718, 0
      %v1786 = vsel %vm739, %v1719, 0
      %v1789 = vsel %vm739, %v1720, 0
      %v1792 = vsel %vm739, %v1721, 0
      %v1795 = vsel %vm739, %v1722, 0
      %v1798 = vsel %vm739, %v1723, 0
      %v1801 = vsel %vm739, %v1724, 0
      %v1804 = vsel %vm739, %v1725, 0
      %v1807 = vsel %vm739, %v1726, 0
      %v1810 = vsel %vm739, %v1727, 0
      %v1813 = vsel %vm739, %v1728, 0
      %v1816 = vsel %vm739, %v1729, 0
      %v1819 = vsel %vm739, %v1730, 0
      %v1822 = vsel %vm739, %v1731, 0
      %v1825 = vsel %vm739, %v1732, 0
      %v1828 = vsel %vm739, %v1733, 0
      %v1831 = vsel %vm739, %v1734, 0
      %v1834 = vsel %vm739, %v1735, 0
      %v1837 = vsel %vm739, %v1736, 0
      %v1840 = vsel %vm739, %v1737, 0
      %v1843 = vsel %vm739, %v1738, 0
      %v1846 = vsel %vm739, %v1739, 0
      %1848 = vmatpush.msra.mxu0 0.0
      %1849 = vmatpush.msra.mxu0 0.0
      %1850 = vmatpush.msra.mxu0 0.0
      %1851 = vmatpush.msra.mxu0 0.0
      %1852 = vmatpush.msra.mxu0 0.0
      %1853 = vmatpush.msra.mxu0 0.0
      %1854 = vmatpush.msra.mxu0 0.0
      %1855 = vmatpush.msra.mxu0 0.0
      %1856 = vmatpush.msra.mxu0 %v1747
      %1857 = vmatpush.msra.mxu0 %v1746
      %1858 = vmatpush.msra.mxu0 %v1745
      %1859 = vmatpush.msra.mxu0 %v1744
      %1860 = vmatpush.msra.mxu0 %v1743
      %1861 = vmatpush.msra.mxu0 %v1742
      %1862 = vmatpush.msra.mxu0 %v1741
      %1863 = vmatpush.msra.mxu0 %v1740
      %1864 = vmatmul.f32.gmra.mxu0 %v1753
      %v1865 = vpop.f32.mrf.mxu0
      %v1866 = vadd.f32 %v1750, %v1865
      %1867 = vmatmul.f32.gmra.mxu0 %v1756
      %v1868 = vpop.f32.mrf.mxu0
      %v1869 = vadd.f32 %v1750, %v1868
      %1870 = vmatmul.f32.gmra.mxu0 %v1759
      %v1871 = vpop.f32.mrf.mxu0
      %v1872 = vadd.f32 %v1750, %v1871
      %1873 = vmatmul.f32.gmra.mxu0 %v1762
      %v1874 = vpop.f32.mrf.mxu0
      %v1875 = vadd.f32 %v1750, %v1874
      %1876 = vmatmul.f32.gmra.mxu0 %v1765
      %v1877 = vpop.f32.mrf.mxu0
      %v1878 = vadd.f32 %v1750, %v1877
      %1879 = vmatmul.f32.gmra.mxu0 %v1768
      %v1880 = vpop.f32.mrf.mxu0
      %v1881 = vadd.f32 %v1750, %v1880
      %1882 = vmatmul.f32.gmra.mxu0 %v1771
      %v1883 = vpop.f32.mrf.mxu0
      %v1884 = vadd.f32 %v1750, %v1883
      %1885 = vmatmul.f32.gmra.mxu0 %v1774
      %v1886 = vpop.f32.mrf.mxu0
      %v1887 = vadd.f32 %v1750, %v1886
      %1888 = vmatmul.f32.gmra.mxu0 %v1777
      %v1889 = vpop.f32.mrf.mxu0
      %v1890 = vadd.f32 %v1750, %v1889
      %1891 = vmatmul.f32.gmra.mxu0 %v1780
      %v1892 = vpop.f32.mrf.mxu0
      %v1893 = vadd.f32 %v1750, %v1892
      %1894 = vmatmul.f32.gmra.mxu0 %v1783
      %v1895 = vpop.f32.mrf.mxu0
      %v1896 = vadd.f32 %v1750, %v1895
      %1897 = vmatmul.f32.gmra.mxu0 %v1786
      %v1898 = vpop.f32.mrf.mxu0
      %v1899 = vadd.f32 %v1750, %v1898
      %1900 = vmatmul.f32.gmra.mxu0 %v1789
      %v1901 = vpop.f32.mrf.mxu0
      %v1902 = vadd.f32 %v1750, %v1901
      %1903 = vmatmul.f32.gmra.mxu0 %v1792
      %v1904 = vpop.f32.mrf.mxu0
      %v1905 = vadd.f32 %v1750, %v1904
      %1906 = vmatmul.f32.gmra.mxu0 %v1795
      %v1907 = vpop.f32.mrf.mxu0
      %v1908 = vadd.f32 %v1750, %v1907
      %1909 = vmatmul.f32.gmra.mxu0 %v1798
      %v1910 = vpop.f32.mrf.mxu0
      %v1911 = vadd.f32 %v1750, %v1910
      %1912 = vmatmul.f32.gmra.mxu0 %v1801
      %v1913 = vpop.f32.mrf.mxu0
      %v1914 = vadd.f32 %v1750, %v1913
      %1915 = vmatmul.f32.gmra.mxu0 %v1804
      %v1916 = vpop.f32.mrf.mxu0
      %v1917 = vadd.f32 %v1750, %v1916
      %1918 = vmatmul.f32.gmra.mxu0 %v1807
      %v1919 = vpop.f32.mrf.mxu0
      %v1920 = vadd.f32 %v1750, %v1919
      %1921 = vmatmul.f32.gmra.mxu0 %v1810
      %v1922 = vpop.f32.mrf.mxu0
      %v1923 = vadd.f32 %v1750, %v1922
      %1924 = vmatmul.f32.gmra.mxu0 %v1813
      %v1925 = vpop.f32.mrf.mxu0
      %v1926 = vadd.f32 %v1750, %v1925
      %1927 = vmatmul.f32.gmra.mxu0 %v1816
      %v1928 = vpop.f32.mrf.mxu0
      %v1929 = vadd.f32 %v1750, %v1928
      %1930 = vmatmul.f32.gmra.mxu0 %v1819
      %v1931 = vpop.f32.mrf.mxu0
      %v1932 = vadd.f32 %v1750, %v1931
      %1933 = vmatmul.f32.gmra.mxu0 %v1822
      %v1934 = vpop.f32.mrf.mxu0
      %v1935 = vadd.f32 %v1750, %v1934
      %1936 = vmatmul.f32.gmra.mxu0 %v1825
      %v1937 = vpop.f32.mrf.mxu0
      %v1938 = vadd.f32 %v1750, %v1937
      %1939 = vmatmul.f32.gmra.mxu0 %v1828
      %v1940 = vpop.f32.mrf.mxu0
      %v1941 = vadd.f32 %v1750, %v1940
      %1942 = vmatmul.f32.gmra.mxu0 %v1831
      %v1943 = vpop.f32.mrf.mxu0
      %v1944 = vadd.f32 %v1750, %v1943
      %1945 = vmatmul.f32.gmra.mxu0 %v1834
      %v1946 = vpop.f32.mrf.mxu0
      %v1947 = vadd.f32 %v1750, %v1946
      %1948 = vmatmul.f32.gmra.mxu0 %v1837
      %v1949 = vpop.f32.mrf.mxu0
      %v1950 = vadd.f32 %v1750, %v1949
      %1951 = vmatmul.f32.gmra.mxu0 %v1840
      %v1952 = vpop.f32.mrf.mxu0
      %v1953 = vadd.f32 %v1750, %v1952
      %1954 = vmatmul.f32.gmra.mxu0 %v1843
      %v1955 = vpop.f32.mrf.mxu0
      %v1956 = vadd.f32 %v1750, %v1955
      %1957 = vmatmul.f32.gmra.mxu0 %v1846
      %v1958 = vpop.f32.mrf.mxu0
      %v1959 = vadd.f32 %v1750, %v1958
      %1960 = vdwg.mxu0
      %1961 = vst [vmem:[%s442] sm:$0xff] %v1866
      %1962 = vst [vmem:[%s442 + $0x8] sm:$0xff] %v1869
      %1963 = vst [vmem:[%s442 + $0x10] sm:$0xff] %v1872
      %1964 = vst [vmem:[%s442 + $0x18] sm:$0xff] %v1875
      %1965 = vst [vmem:[%s442 + $0x20] sm:$0xff] %v1878
      %1966 = vst [vmem:[%s442 + $0x28] sm:$0xff] %v1881
      %1967 = vst [vmem:[%s442 + $0x30] sm:$0xff] %v1884
      %1968 = vst [vmem:[%s442 + $0x38] sm:$0xff] %v1887
      %1969 = vst [vmem:[%s442 + $0x40] sm:$0xff] %v1890
      %1970 = vst [vmem:[%s442 + $0x48] sm:$0xff] %v1893
      %1971 = vst [vmem:[%s442 + $0x50] sm:$0xff] %v1896
      %1972 = vst [vmem:[%s442 + $0x58] sm:$0xff] %v1899
      %1973 = vst [vmem:[%s442 + $0x60] sm:$0xff] %v1902
      %1974 = vst [vmem:[%s442 + $0x68] sm:$0xff] %v1905
      %1975 = vst [vmem:[%s442 + $0x70] sm:$0xff] %v1908
      %1976 = vst [vmem:[%s442 + $0x78] sm:$0xff] %v1911
      %1977 = vst [vmem:[%s442 + $0x80] sm:$0xff] %v1914
      %1978 = vst [vmem:[%s442 + $0x88] sm:$0xff] %v1917
      %1979 = vst [vmem:[%s442 + $0x90] sm:$0xff] %v1920
      %1980 = vst [vmem:[%s442 + $0x98] sm:$0xff] %v1923
      %1981 = vst [vmem:[%s442 + $0xa0] sm:$0xff] %v1926
      %1982 = vst [vmem:[%s442 + $0xa8] sm:$0xff] %v1929
      %1983 = vst [vmem:[%s442 + $0xb0] sm:$0xff] %v1932
      %1984 = vst [vmem:[%s442 + $0xb8] sm:$0xff] %v1935
      %1985 = vst [vmem:[%s442 + $0xc0] sm:$0xff] %v1938
      %1986 = vst [vmem:[%s442 + $0xc8] sm:$0xff] %v1941
      %1987 = vst [vmem:[%s442 + $0xd0] sm:$0xff] %v1944
      %1988 = vst [vmem:[%s442 + $0xd8] sm:$0xff] %v1947
      %1989 = vst [vmem:[%s442 + $0xe0] sm:$0xff] %v1950
      %1990 = vst [vmem:[%s442 + $0xe8] sm:$0xff] %v1953
      %1991 = vst [vmem:[%s442 + $0xf0] sm:$0xff] %v1956
      %1992 = vst [vmem:[%s442 + $0xf8] sm:$0xff] %v1959
      %s1993 = scalar_lea.vmem %s436, 256
      %v1994 = vld [vmem:[%s1993] sm:$0xff]
      %v1995 = vld [vmem:[%s1993 + $0x8] sm:$0xff]
      %v1996 = vld [vmem:[%s1993 + $0x10] sm:$0xff]
      %v1997 = vld [vmem:[%s1993 + $0x18] sm:$0xff]
      %v1998 = vld [vmem:[%s1993 + $0x20] sm:$0xff]
      %v1999 = vld [vmem:[%s1993 + $0x28] sm:$0xff]
      %v2000 = vld [vmem:[%s1993 + $0x30] sm:$0xff]
      %v2001 = vld [vmem:[%s1993 + $0x38] sm:$0xff]
      %v2002 = vld [vmem:[%s1993 + $0x40] sm:$0xff]
      %v2003 = vld [vmem:[%s1993 + $0x48] sm:$0xff]
      %v2004 = vld [vmem:[%s1993 + $0x50] sm:$0xff]
      %v2005 = vld [vmem:[%s1993 + $0x58] sm:$0xff]
      %v2006 = vld [vmem:[%s1993 + $0x60] sm:$0xff]
      %v2007 = vld [vmem:[%s1993 + $0x68] sm:$0xff]
      %v2008 = vld [vmem:[%s1993 + $0x70] sm:$0xff]
      %v2009 = vld [vmem:[%s1993 + $0x78] sm:$0xff]
      %v2010 = vld [vmem:[%s1993 + $0x80] sm:$0xff]
      %v2011 = vld [vmem:[%s1993 + $0x88] sm:$0xff]
      %v2012 = vld [vmem:[%s1993 + $0x90] sm:$0xff]
      %v2013 = vld [vmem:[%s1993 + $0x98] sm:$0xff]
      %v2014 = vld [vmem:[%s1993 + $0xa0] sm:$0xff]
      %v2015 = vld [vmem:[%s1993 + $0xa8] sm:$0xff]
      %v2016 = vld [vmem:[%s1993 + $0xb0] sm:$0xff]
      %v2017 = vld [vmem:[%s1993 + $0xb8] sm:$0xff]
      %v2018 = vld [vmem:[%s1993 + $0xc0] sm:$0xff]
      %v2019 = vld [vmem:[%s1993 + $0xc8] sm:$0xff]
      %v2020 = vld [vmem:[%s1993 + $0xd0] sm:$0xff]
      %v2021 = vld [vmem:[%s1993 + $0xd8] sm:$0xff]
      %v2022 = vld [vmem:[%s1993 + $0xe0] sm:$0xff]
      %v2023 = vld [vmem:[%s1993 + $0xe8] sm:$0xff]
      %v2024 = vld [vmem:[%s1993 + $0xf0] sm:$0xff]
      %v2025 = vld [vmem:[%s1993 + $0xf8] sm:$0xff]
      %v2026 = vld [vmem:[%s1] sm:$0xf]
      %v2027 = vld [vmem:[%s2] sm:$0x1]
      %v2029 = vperm.slane %v2027, 0
      %v2032 = vsel %vm481, %v1994, 0
      %v2035 = vsel %vm481, %v1995, 0
      %v2038 = vsel %vm481, %v1996, 0
      %v2041 = vsel %vm481, %v1997, 0
      %v2044 = vsel %vm481, %v1998, 0
      %v2047 = vsel %vm481, %v1999, 0
      %v2050 = vsel %vm481, %v2000, 0
      %v2053 = vsel %vm481, %v2001, 0
      %v2056 = vsel %vm481, %v2002, 0
      %v2059 = vsel %vm481, %v2003, 0
      %v2062 = vsel %vm481, %v2004, 0
      %v2065 = vsel %vm481, %v2005, 0
      %v2068 = vsel %vm481, %v2006, 0
      %v2071 = vsel %vm481, %v2007, 0
      %v2074 = vsel %vm481, %v2008, 0
      %v2077 = vsel %vm481, %v2009, 0
      %v2080 = vsel %vm481, %v2010, 0
      %v2083 = vsel %vm481, %v2011, 0
      %v2086 = vsel %vm481, %v2012, 0
      %v2089 = vsel %vm481, %v2013, 0
      %v2092 = vsel %vm481, %v2014, 0
      %v2095 = vsel %vm481, %v2015, 0
      %v2098 = vsel %vm481, %v2016, 0
      %v2101 = vsel %vm481, %v2017, 0
      %v2104 = vsel %vm481, %v2018, 0
      %v2107 = vsel %vm481, %v2019, 0
      %v2110 = vsel %vm481, %v2020, 0
      %v2113 = vsel %vm481, %v2021, 0
      %v2116 = vsel %vm481, %v2022, 0
      %v2119 = vsel %vm481, %v2023, 0
      %v2122 = vsel %vm481, %v2024, 0
      %v2125 = vsel %vm481, %v2025, 0
      %v2128 = vsel %vm578, %v2026, 0
      %2130 = vmatpush.msra.mxu0 0.0
      %2131 = vmatpush.msra.mxu0 0.0
      %2132 = vmatpush.msra.mxu0 0.0
      %2133 = vmatpush.msra.mxu0 0.0
      %2134 = vmatpush.msra.mxu0 0.0
      %2135 = vmatpush.msra.mxu0 0.0
      %2136 = vmatpush.msra.mxu0 0.0
      %2137 = vmatpush.msra.mxu0 0.0
      %2138 = vmatpush.msra.mxu0 0.0
      %2139 = vmatpush.msra.mxu0 0.0
      %2140 = vmatpush.msra.mxu0 0.0
      %2141 = vmatpush.msra.mxu0 0.0
      %2142 = vmatpush.msra.mxu0 0.0
      %2143 = vmatpush.msra.mxu0 0.0
      %2144 = vmatpush.msra.mxu0 0.0
      %2145 = vmatpush.msra.mxu0 %v2128
      %2146 = vmatmul.f32.gmra.mxu0 %v2032
      %v2147 = vpop.f32.mrf.mxu0
      %v2148 = vadd.f32 %v2029, %v2147
      %2149 = vmatmul.f32.gmra.mxu0 %v2035
      %v2150 = vpop.f32.mrf.mxu0
      %v2151 = vadd.f32 %v2029, %v2150
      %2152 = vmatmul.f32.gmra.mxu0 %v2038
      %v2153 = vpop.f32.mrf.mxu0
      %v2154 = vadd.f32 %v2029, %v2153
      %2155 = vmatmul.f32.gmra.mxu0 %v2041
      %v2156 = vpop.f32.mrf.mxu0
      %v2157 = vadd.f32 %v2029, %v2156
      %2158 = vmatmul.f32.gmra.mxu0 %v2044
      %v2159 = vpop.f32.mrf.mxu0
      %v2160 = vadd.f32 %v2029, %v2159
      %2161 = vmatmul.f32.gmra.mxu0 %v2047
      %v2162 = vpop.f32.mrf.mxu0
      %v2163 = vadd.f32 %v2029, %v2162
      %2164 = vmatmul.f32.gmra.mxu0 %v2050
      %v2165 = vpop.f32.mrf.mxu0
      %v2166 = vadd.f32 %v2029, %v2165
      %2167 = vmatmul.f32.gmra.mxu0 %v2053
      %v2168 = vpop.f32.mrf.mxu0
      %v2169 = vadd.f32 %v2029, %v2168
      %2170 = vmatmul.f32.gmra.mxu0 %v2056
      %v2171 = vpop.f32.mrf.mxu0
      %v2172 = vadd.f32 %v2029, %v2171
      %2173 = vmatmul.f32.gmra.mxu0 %v2059
      %v2174 = vpop.f32.mrf.mxu0
      %v2175 = vadd.f32 %v2029, %v2174
      %2176 = vmatmul.f32.gmra.mxu0 %v2062
      %v2177 = vpop.f32.mrf.mxu0
      %v2178 = vadd.f32 %v2029, %v2177
      %2179 = vmatmul.f32.gmra.mxu0 %v2065
      %v2180 = vpop.f32.mrf.mxu0
      %v2181 = vadd.f32 %v2029, %v2180
      %2182 = vmatmul.f32.gmra.mxu0 %v2068
      %v2183 = vpop.f32.mrf.mxu0
      %v2184 = vadd.f32 %v2029, %v2183
      %2185 = vmatmul.f32.gmra.mxu0 %v2071
      %v2186 = vpop.f32.mrf.mxu0
      %v2187 = vadd.f32 %v2029, %v2186
      %2188 = vmatmul.f32.gmra.mxu0 %v2074
      %v2189 = vpop.f32.mrf.mxu0
      %v2190 = vadd.f32 %v2029, %v2189
      %2191 = vmatmul.f32.gmra.mxu0 %v2077
      %v2192 = vpop.f32.mrf.mxu0
      %v2193 = vadd.f32 %v2029, %v2192
      %2194 = vmatmul.f32.gmra.mxu0 %v2080
      %v2195 = vpop.f32.mrf.mxu0
      %v2196 = vadd.f32 %v2029, %v2195
      %2197 = vmatmul.f32.gmra.mxu0 %v2083
      %v2198 = vpop.f32.mrf.mxu0
      %v2199 = vadd.f32 %v2029, %v2198
      %2200 = vmatmul.f32.gmra.mxu0 %v2086
      %v2201 = vpop.f32.mrf.mxu0
      %v2202 = vadd.f32 %v2029, %v2201
      %2203 = vmatmul.f32.gmra.mxu0 %v2089
      %v2204 = vpop.f32.mrf.mxu0
      %v2205 = vadd.f32 %v2029, %v2204
      %2206 = vmatmul.f32.gmra.mxu0 %v2092
      %v2207 = vpop.f32.mrf.mxu0
      %v2208 = vadd.f32 %v2029, %v2207
      %2209 = vmatmul.f32.gmra.mxu0 %v2095
      %v2210 = vpop.f32.mrf.mxu0
      %v2211 = vadd.f32 %v2029, %v2210
      %2212 = vmatmul.f32.gmra.mxu0 %v2098
      %v2213 = vpop.f32.mrf.mxu0
      %v2214 = vadd.f32 %v2029, %v2213
      %2215 = vmatmul.f32.gmra.mxu0 %v2101
      %v2216 = vpop.f32.mrf.mxu0
      %v2217 = vadd.f32 %v2029, %v2216
      %2218 = vmatmul.f32.gmra.mxu0 %v2104
      %v2219 = vpop.f32.mrf.mxu0
      %v2220 = vadd.f32 %v2029, %v2219
      %2221 = vmatmul.f32.gmra.mxu0 %v2107
      %v2222 = vpop.f32.mrf.mxu0
      %v2223 = vadd.f32 %v2029, %v2222
      %2224 = vmatmul.f32.gmra.mxu0 %v2110
      %v2225 = vpop.f32.mrf.mxu0
      %v2226 = vadd.f32 %v2029, %v2225
      %2227 = vmatmul.f32.gmra.mxu0 %v2113
      %v2228 = vpop.f32.mrf.mxu0
      %v2229 = vadd.f32 %v2029, %v2228
      %2230 = vmatmul.f32.gmra.mxu0 %v2116
      %v2231 = vpop.f32.mrf.mxu0
      %v2232 = vadd.f32 %v2029, %v2231
      %2233 = vmatmul.f32.gmra.mxu0 %v2119
      %v2234 = vpop.f32.mrf.mxu0
      %v2235 = vadd.f32 %v2029, %v2234
      %2236 = vmatmul.f32.gmra.mxu0 %v2122
      %v2237 = vpop.f32.mrf.mxu0
      %v2238 = vadd.f32 %v2029, %v2237
      %2239 = vmatmul.f32.gmra.mxu0 %v2125
      %v2240 = vpop.f32.mrf.mxu0
      %v2241 = vadd.f32 %v2029, %v2240
      %2242 = vdwg.mxu0
      %v2243 = vtanh.pop %v2148
      %v2244 = vtanh.pop %v2151
      %v2245 = vtanh.pop %v2154
      %v2246 = vtanh.pop %v2157
      %v2247 = vtanh.pop %v2160
      %v2248 = vtanh.pop %v2163
      %v2249 = vtanh.pop %v2166
      %v2250 = vtanh.pop %v2169
      %v2251 = vtanh.pop %v2172
      %v2252 = vtanh.pop %v2175
      %v2253 = vtanh.pop %v2178
      %v2254 = vtanh.pop %v2181
      %v2255 = vtanh.pop %v2184
      %v2256 = vtanh.pop %v2187
      %v2257 = vtanh.pop %v2190
      %v2258 = vtanh.pop %v2193
      %v2259 = vtanh.pop %v2196
      %v2260 = vtanh.pop %v2199
      %v2261 = vtanh.pop %v2202
      %v2262 = vtanh.pop %v2205
      %v2263 = vtanh.pop %v2208
      %v2264 = vtanh.pop %v2211
      %v2265 = vtanh.pop %v2214
      %v2266 = vtanh.pop %v2217
      %v2267 = vtanh.pop %v2220
      %v2268 = vtanh.pop %v2223
      %v2269 = vtanh.pop %v2226
      %v2270 = vtanh.pop %v2229
      %v2271 = vtanh.pop %v2232
      %v2272 = vtanh.pop %v2235
      %v2273 = vtanh.pop %v2238
      %v2274 = vtanh.pop %v2241
      %v2275 = vld [vmem:[%s3] sm:$0xff]
      %v2276 = vld [vmem:[%s3 + $0x8] sm:$0xff]
      %v2277 = vld [vmem:[%s3 + $0x10] sm:$0xff]
      %v2278 = vld [vmem:[%s3 + $0x18] sm:$0xff]
      %v2279 = vld [vmem:[%s3 + $0x20] sm:$0xff]
      %v2280 = vld [vmem:[%s3 + $0x28] sm:$0xff]
      %v2281 = vld [vmem:[%s3 + $0x30] sm:$0xff]
      %v2282 = vld [vmem:[%s3 + $0x38] sm:$0xff]
      %v2283 = vld [vmem:[%s4] sm:$0x1]
      %v2285 = vperm.slane %v2283, 0
      %v2288 = vsel %vm739, %v2243, 0
      %v2291 = vsel %vm739, %v2244, 0
      %v2294 = vsel %vm739, %v2245, 0
      %v2297 = vsel %vm739, %v2246, 0
      %v2300 = vsel %vm739, %v2247, 0
      %v2303 = vsel %vm739, %v2248, 0
      %v2306 = vsel %vm739, %v2249, 0
      %v2309 = vsel %vm739, %v2250, 0
      %v2312 = vsel %vm739, %v2251, 0
      %v2315 = vsel %vm739, %v2252, 0
      %v2318 = vsel %vm739, %v2253, 0
      %v2321 = vsel %vm739, %v2254, 0
      %v2324 = vsel %vm739, %v2255, 0
      %v2327 = vsel %vm739, %v2256, 0
      %v2330 = vsel %vm739, %v2257, 0
      %v2333 = vsel %vm739, %v2258, 0
      %v2336 = vsel %vm739, %v2259, 0
      %v2339 = vsel %vm739, %v2260, 0
      %v2342 = vsel %vm739, %v2261, 0
      %v2345 = vsel %vm739, %v2262, 0
      %v2348 = vsel %vm739, %v2263, 0
      %v2351 = vsel %vm739, %v2264, 0
      %v2354 = vsel %vm739, %v2265, 0
      %v2357 = vsel %vm739, %v2266, 0
      %v2360 = vsel %vm739, %v2267, 0
      %v2363 = vsel %vm739, %v2268, 0
      %v2366 = vsel %vm739, %v2269, 0
      %v2369 = vsel %vm739, %v2270, 0
      %v2372 = vsel %vm739, %v2271, 0
      %v2375 = vsel %vm739, %v2272, 0
      %v2378 = vsel %vm739, %v2273, 0
      %v2381 = vsel %vm739, %v2274, 0
      %2383 = vmatpush.msra.mxu0 0.0
      %2384 = vmatpush.msra.mxu0 0.0
      %2385 = vmatpush.msra.mxu0 0.0
      %2386 = vmatpush.msra.mxu0 0.0
      %2387 = vmatpush.msra.mxu0 0.0
      %2388 = vmatpush.msra.mxu0 0.0
      %2389 = vmatpush.msra.mxu0 0.0
      %2390 = vmatpush.msra.mxu0 0.0
      %2391 = vmatpush.msra.mxu0 %v2282
      %2392 = vmatpush.msra.mxu0 %v2281
      %2393 = vmatpush.msra.mxu0 %v2280
      %2394 = vmatpush.msra.mxu0 %v2279
      %2395 = vmatpush.msra.mxu0 %v2278
      %2396 = vmatpush.msra.mxu0 %v2277
      %2397 = vmatpush.msra.mxu0 %v2276
      %2398 = vmatpush.msra.mxu0 %v2275
      %2399 = vmatmul.f32.gmra.mxu0 %v2288
      %v2400 = vpop.f32.mrf.mxu0
      %v2401 = vadd.f32 %v2285, %v2400
      %2402 = vmatmul.f32.gmra.mxu0 %v2291
      %v2403 = vpop.f32.mrf.mxu0
      %v2404 = vadd.f32 %v2285, %v2403
      %2405 = vmatmul.f32.gmra.mxu0 %v2294
      %v2406 = vpop.f32.mrf.mxu0
      %v2407 = vadd.f32 %v2285, %v2406
      %2408 = vmatmul.f32.gmra.mxu0 %v2297
      %v2409 = vpop.f32.mrf.mxu0
      %v2410 = vadd.f32 %v2285, %v2409
      %2411 = vmatmul.f32.gmra.mxu0 %v2300
      %v2412 = vpop.f32.mrf.mxu0
      %v2413 = vadd.f32 %v2285, %v2412
      %2414 = vmatmul.f32.gmra.mxu0 %v2303
      %v2415 = vpop.f32.mrf.mxu0
      %v2416 = vadd.f32 %v2285, %v2415
      %2417 = vmatmul.f32.gmra.mxu0 %v2306
      %v2418 = vpop.f32.mrf.mxu0
      %v2419 = vadd.f32 %v2285, %v2418
      %2420 = vmatmul.f32.gmra.mxu0 %v2309
      %v2421 = vpop.f32.mrf.mxu0
      %v2422 = vadd.f32 %v2285, %v2421
      %2423 = vmatmul.f32.gmra.mxu0 %v2312
      %v2424 = vpop.f32.mrf.mxu0
      %v2425 = vadd.f32 %v2285, %v2424
      %2426 = vmatmul.f32.gmra.mxu0 %v2315
      %v2427 = vpop.f32.mrf.mxu0
      %v2428 = vadd.f32 %v2285, %v2427
      %2429 = vmatmul.f32.gmra.mxu0 %v2318
      %v2430 = vpop.f32.mrf.mxu0
      %v2431 = vadd.f32 %v2285, %v2430
      %2432 = vmatmul.f32.gmra.mxu0 %v2321
      %v2433 = vpop.f32.mrf.mxu0
      %v2434 = vadd.f32 %v2285, %v2433
      %2435 = vmatmul.f32.gmra.mxu0 %v2324
      %v2436 = vpop.f32.mrf.mxu0
      %v2437 = vadd.f32 %v2285, %v2436
      %2438 = vmatmul.f32.gmra.mxu0 %v2327
      %v2439 = vpop.f32.mrf.mxu0
      %v2440 = vadd.f32 %v2285, %v2439
      %2441 = vmatmul.f32.gmra.mxu0 %v2330
      %v2442 = vpop.f32.mrf.mxu0
      %v2443 = vadd.f32 %v2285, %v2442
      %2444 = vmatmul.f32.gmra.mxu0 %v2333
      %v2445 = vpop.f32.mrf.mxu0
      %v2446 = vadd.f32 %v2285, %v2445
      %2447 = vmatmul.f32.gmra.mxu0 %v2336
      %v2448 = vpop.f32.mrf.mxu0
      %v2449 = vadd.f32 %v2285, %v2448
      %2450 = vmatmul.f32.gmra.mxu0 %v2339
      %v2451 = vpop.f32.mrf.mxu0
      %v2452 = vadd.f32 %v2285, %v2451
      %2453 = vmatmul.f32.gmra.mxu0 %v2342
      %v2454 = vpop.f32.mrf.mxu0
      %v2455 = vadd.f32 %v2285, %v2454
      %2456 = vmatmul.f32.gmra.mxu0 %v2345
      %v2457 = vpop.f32.mrf.mxu0
      %v2458 = vadd.f32 %v2285, %v2457
      %2459 = vmatmul.f32.gmra.mxu0 %v2348
      %v2460 = vpop.f32.mrf.mxu0
      %v2461 = vadd.f32 %v2285, %v2460
      %2462 = vmatmul.f32.gmra.mxu0 %v2351
      %v2463 = vpop.f32.mrf.mxu0
      %v2464 = vadd.f32 %v2285, %v2463
      %2465 = vmatmul.f32.gmra.mxu0 %v2354
      %v2466 = vpop.f32.mrf.mxu0
      %v2467 = vadd.f32 %v2285, %v2466
      %2468 = vmatmul.f32.gmra.mxu0 %v2357
      %v2469 = vpop.f32.mrf.mxu0
      %v2470 = vadd.f32 %v2285, %v2469
      %2471 = vmatmul.f32.gmra.mxu0 %v2360
      %v2472 = vpop.f32.mrf.mxu0
      %v2473 = vadd.f32 %v2285, %v2472
      %2474 = vmatmul.f32.gmra.mxu0 %v2363
      %v2475 = vpop.f32.mrf.mxu0
      %v2476 = vadd.f32 %v2285, %v2475
      %2477 = vmatmul.f32.gmra.mxu0 %v2366
      %v2478 = vpop.f32.mrf.mxu0
      %v2479 = vadd.f32 %v2285, %v2478
      %2480 = vmatmul.f32.gmra.mxu0 %v2369
      %v2481 = vpop.f32.mrf.mxu0
      %v2482 = vadd.f32 %v2285, %v2481
      %2483 = vmatmul.f32.gmra.mxu0 %v2372
      %v2484 = vpop.f32.mrf.mxu0
      %v2485 = vadd.f32 %v2285, %v2484
      %2486 = vmatmul.f32.gmra.mxu0 %v2375
      %v2487 = vpop.f32.mrf.mxu0
      %v2488 = vadd.f32 %v2285, %v2487
      %2489 = vmatmul.f32.gmra.mxu0 %v2378
      %v2490 = vpop.f32.mrf.mxu0
      %v2491 = vadd.f32 %v2285, %v2490
      %2492 = vmatmul.f32.gmra.mxu0 %v2381
      %v2493 = vpop.f32.mrf.mxu0
      %v2494 = vadd.f32 %v2285, %v2493
      %2495 = vdwg.mxu0
      %v2496 = vtanh.pop %v2401
      %v2497 = vtanh.pop %v2404
      %v2498 = vtanh.pop %v2407
      %v2499 = vtanh.pop %v2410
      %v2500 = vtanh.pop %v2413
      %v2501 = vtanh.pop %v2416
      %v2502 = vtanh.pop %v2419
      %v2503 = vtanh.pop %v2422
      %v2504 = vtanh.pop %v2425
      %v2505 = vtanh.pop %v2428
      %v2506 = vtanh.pop %v2431
      %v2507 = vtanh.pop %v2434
      %v2508 = vtanh.pop %v2437
      %v2509 = vtanh.pop %v2440
      %v2510 = vtanh.pop %v2443
      %v2511 = vtanh.pop %v2446
      %v2512 = vtanh.pop %v2449
      %v2513 = vtanh.pop %v2452
      %v2514 = vtanh.pop %v2455
      %v2515 = vtanh.pop %v2458
      %v2516 = vtanh.pop %v2461
      %v2517 = vtanh.pop %v2464
      %v2518 = vtanh.pop %v2467
      %v2519 = vtanh.pop %v2470
      %v2520 = vtanh.pop %v2473
      %v2521 = vtanh.pop %v2476
      %v2522 = vtanh.pop %v2479
      %v2523 = vtanh.pop %v2482
      %v2524 = vtanh.pop %v2485
      %v2525 = vtanh.pop %v2488
      %v2526 = vtanh.pop %v2491
      %v2527 = vtanh.pop %v2494
      %v2528 = vld [vmem:[%s5] sm:$0xff]
      %v2529 = vld [vmem:[%s5 + $0x8] sm:$0xff]
      %v2530 = vld [vmem:[%s5 + $0x10] sm:$0xff]
      %v2531 = vld [vmem:[%s5 + $0x18] sm:$0xff]
      %v2532 = vld [vmem:[%s5 + $0x20] sm:$0xff]
      %v2533 = vld [vmem:[%s5 + $0x28] sm:$0xff]
      %v2534 = vld [vmem:[%s5 + $0x30] sm:$0xff]
      %v2535 = vld [vmem:[%s5 + $0x38] sm:$0xff]
      %v2536 = vld [vmem:[%s6] sm:$0x1]
      %v2538 = vperm.slane %v2536, 0
      %v2541 = vsel %vm739, %v2496, 0
      %v2544 = vsel %vm739, %v2497, 0
      %v2547 = vsel %vm739, %v2498, 0
      %v2550 = vsel %vm739, %v2499, 0
      %v2553 = vsel %vm739, %v2500, 0
      %v2556 = vsel %vm739, %v2501, 0
      %v2559 = vsel %vm739, %v2502, 0
      %v2562 = vsel %vm739, %v2503, 0
      %v2565 = vsel %vm739, %v2504, 0
      %v2568 = vsel %vm739, %v2505, 0
      %v2571 = vsel %vm739, %v2506, 0
      %v2574 = vsel %vm739, %v2507, 0
      %v2577 = vsel %vm739, %v2508, 0
      %v2580 = vsel %vm739, %v2509, 0
      %v2583 = vsel %vm739, %v2510, 0
      %v2586 = vsel %vm739, %v2511, 0
      %v2589 = vsel %vm739, %v2512, 0
      %v2592 = vsel %vm739, %v2513, 0
      %v2595 = vsel %vm739, %v2514, 0
      %v2598 = vsel %vm739, %v2515, 0
      %v2601 = vsel %vm739, %v2516, 0
      %v2604 = vsel %vm739, %v2517, 0
      %v2607 = vsel %vm739, %v2518, 0
      %v2610 = vsel %vm739, %v2519, 0
      %v2613 = vsel %vm739, %v2520, 0
      %v2616 = vsel %vm739, %v2521, 0
      %v2619 = vsel %vm739, %v2522, 0
      %v2622 = vsel %vm739, %v2523, 0
      %v2625 = vsel %vm739, %v2524, 0
      %v2628 = vsel %vm739, %v2525, 0
      %v2631 = vsel %vm739, %v2526, 0
      %v2634 = vsel %vm739, %v2527, 0
      %2636 = vmatpush.msra.mxu0 0.0
      %2637 = vmatpush.msra.mxu0 0.0
      %2638 = vmatpush.msra.mxu0 0.0
      %2639 = vmatpush.msra.mxu0 0.0
      %2640 = vmatpush.msra.mxu0 0.0
      %2641 = vmatpush.msra.mxu0 0.0
      %2642 = vmatpush.msra.mxu0 0.0
      %2643 = vmatpush.msra.mxu0 0.0
      %2644 = vmatpush.msra.mxu0 %v2535
      %2645 = vmatpush.msra.mxu0 %v2534
      %2646 = vmatpush.msra.mxu0 %v2533
      %2647 = vmatpush.msra.mxu0 %v2532
      %2648 = vmatpush.msra.mxu0 %v2531
      %2649 = vmatpush.msra.mxu0 %v2530
      %2650 = vmatpush.msra.mxu0 %v2529
      %2651 = vmatpush.msra.mxu0 %v2528
      %2652 = vmatmul.f32.gmra.mxu0 %v2541
      %v2653 = vpop.f32.mrf.mxu0
      %v2654 = vadd.f32 %v2538, %v2653
      %2655 = vmatmul.f32.gmra.mxu0 %v2544
      %v2656 = vpop.f32.mrf.mxu0
      %v2657 = vadd.f32 %v2538, %v2656
      %2658 = vmatmul.f32.gmra.mxu0 %v2547
      %v2659 = vpop.f32.mrf.mxu0
      %v2660 = vadd.f32 %v2538, %v2659
      %2661 = vmatmul.f32.gmra.mxu0 %v2550
      %v2662 = vpop.f32.mrf.mxu0
      %v2663 = vadd.f32 %v2538, %v2662
      %2664 = vmatmul.f32.gmra.mxu0 %v2553
      %v2665 = vpop.f32.mrf.mxu0
      %v2666 = vadd.f32 %v2538, %v2665
      %2667 = vmatmul.f32.gmra.mxu0 %v2556
      %v2668 = vpop.f32.mrf.mxu0
      %v2669 = vadd.f32 %v2538, %v2668
      %2670 = vmatmul.f32.gmra.mxu0 %v2559
      %v2671 = vpop.f32.mrf.mxu0
      %v2672 = vadd.f32 %v2538, %v2671
      %2673 = vmatmul.f32.gmra.mxu0 %v2562
      %v2674 = vpop.f32.mrf.mxu0
      %v2675 = vadd.f32 %v2538, %v2674
      %2676 = vmatmul.f32.gmra.mxu0 %v2565
      %v2677 = vpop.f32.mrf.mxu0
      %v2678 = vadd.f32 %v2538, %v2677
      %2679 = vmatmul.f32.gmra.mxu0 %v2568
      %v2680 = vpop.f32.mrf.mxu0
      %v2681 = vadd.f32 %v2538, %v2680
      %2682 = vmatmul.f32.gmra.mxu0 %v2571
      %v2683 = vpop.f32.mrf.mxu0
      %v2684 = vadd.f32 %v2538, %v2683
      %2685 = vmatmul.f32.gmra.mxu0 %v2574
      %v2686 = vpop.f32.mrf.mxu0
      %v2687 = vadd.f32 %v2538, %v2686
      %2688 = vmatmul.f32.gmra.mxu0 %v2577
      %v2689 = vpop.f32.mrf.mxu0
      %v2690 = vadd.f32 %v2538, %v2689
      %2691 = vmatmul.f32.gmra.mxu0 %v2580
      %v2692 = vpop.f32.mrf.mxu0
      %v2693 = vadd.f32 %v2538, %v2692
      %2694 = vmatmul.f32.gmra.mxu0 %v2583
      %v2695 = vpop.f32.mrf.mxu0
      %v2696 = vadd.f32 %v2538, %v2695
      %2697 = vmatmul.f32.gmra.mxu0 %v2586
      %v2698 = vpop.f32.mrf.mxu0
      %v2699 = vadd.f32 %v2538, %v2698
      %2700 = vmatmul.f32.gmra.mxu0 %v2589
      %v2701 = vpop.f32.mrf.mxu0
      %v2702 = vadd.f32 %v2538, %v2701
      %2703 = vmatmul.f32.gmra.mxu0 %v2592
      %v2704 = vpop.f32.mrf.mxu0
      %v2705 = vadd.f32 %v2538, %v2704
      %2706 = vmatmul.f32.gmra.mxu0 %v2595
      %v2707 = vpop.f32.mrf.mxu0
      %v2708 = vadd.f32 %v2538, %v2707
      %2709 = vmatmul.f32.gmra.mxu0 %v2598
      %v2710 = vpop.f32.mrf.mxu0
      %v2711 = vadd.f32 %v2538, %v2710
      %2712 = vmatmul.f32.gmra.mxu0 %v2601
      %v2713 = vpop.f32.mrf.mxu0
      %v2714 = vadd.f32 %v2538, %v2713
      %2715 = vmatmul.f32.gmra.mxu0 %v2604
      %v2716 = vpop.f32.mrf.mxu0
      %v2717 = vadd.f32 %v2538, %v2716
      %2718 = vmatmul.f32.gmra.mxu0 %v2607
      %v2719 = vpop.f32.mrf.mxu0
      %v2720 = vadd.f32 %v2538, %v2719
      %2721 = vmatmul.f32.gmra.mxu0 %v2610
      %v2722 = vpop.f32.mrf.mxu0
      %v2723 = vadd.f32 %v2538, %v2722
      %2724 = vmatmul.f32.gmra.mxu0 %v2613
      %v2725 = vpop.f32.mrf.mxu0
      %v2726 = vadd.f32 %v2538, %v2725
      %2727 = vmatmul.f32.gmra.mxu0 %v2616
      %v2728 = vpop.f32.mrf.mxu0
      %v2729 = vadd.f32 %v2538, %v2728
      %2730 = vmatmul.f32.gmra.mxu0 %v2619
      %v2731 = vpop.f32.mrf.mxu0
      %v2732 = vadd.f32 %v2538, %v2731
      %2733 = vmatmul.f32.gmra.mxu0 %v2622
      %v2734 = vpop.f32.mrf.mxu0
      %v2735 = vadd.f32 %v2538, %v2734
      %2736 = vmatmul.f32.gmra.mxu0 %v2625
      %v2737 = vpop.f32.mrf.mxu0
      %v2738 = vadd.f32 %v2538, %v2737
      %2739 = vmatmul.f32.gmra.mxu0 %v2628
      %v2740 = vpop.f32.mrf.mxu0
      %v2741 = vadd.f32 %v2538, %v2740
      %2742 = vmatmul.f32.gmra.mxu0 %v2631
      %v2743 = vpop.f32.mrf.mxu0
      %v2744 = vadd.f32 %v2538, %v2743
      %2745 = vmatmul.f32.gmra.mxu0 %v2634
      %v2746 = vpop.f32.mrf.mxu0
      %v2747 = vadd.f32 %v2538, %v2746
      %2748 = vdwg.mxu0
      %v2749 = vtanh.pop %v2654
      %v2750 = vtanh.pop %v2657
      %v2751 = vtanh.pop %v2660
      %v2752 = vtanh.pop %v2663
      %v2753 = vtanh.pop %v2666
      %v2754 = vtanh.pop %v2669
      %v2755 = vtanh.pop %v2672
      %v2756 = vtanh.pop %v2675
      %v2757 = vtanh.pop %v2678
      %v2758 = vtanh.pop %v2681
      %v2759 = vtanh.pop %v2684
      %v2760 = vtanh.pop %v2687
      %v2761 = vtanh.pop %v2690
      %v2762 = vtanh.pop %v2693
      %v2763 = vtanh.pop %v2696
      %v2764 = vtanh.pop %v2699
      %v2765 = vtanh.pop %v2702
      %v2766 = vtanh.pop %v2705
      %v2767 = vtanh.pop %v2708
      %v2768 = vtanh.pop %v2711
      %v2769 = vtanh.pop %v2714
      %v2770 = vtanh.pop %v2717
      %v2771 = vtanh.pop %v2720
      %v2772 = vtanh.pop %v2723
      %v2773 = vtanh.pop %v2726
      %v2774 = vtanh.pop %v2729
      %v2775 = vtanh.pop %v2732
      %v2776 = vtanh.pop %v2735
      %v2777 = vtanh.pop %v2738
      %v2778 = vtanh.pop %v2741
      %v2779 = vtanh.pop %v2744
      %v2780 = vtanh.pop %v2747
      %v2781 = vld [vmem:[%s7] sm:$0xff]
      %v2782 = vld [vmem:[%s7 + $0x8] sm:$0xff]
      %v2783 = vld [vmem:[%s7 + $0x10] sm:$0xff]
      %v2784 = vld [vmem:[%s7 + $0x18] sm:$0xff]
      %v2785 = vld [vmem:[%s7 + $0x20] sm:$0xff]
      %v2786 = vld [vmem:[%s7 + $0x28] sm:$0xff]
      %v2787 = vld [vmem:[%s7 + $0x30] sm:$0xff]
      %v2788 = vld [vmem:[%s7 + $0x38] sm:$0xff]
      %v2789 = vld [vmem:[%s8] sm:$0x1]
      %v2791 = vperm.slane %v2789, 0
      %v2794 = vsel %vm739, %v2749, 0
      %v2797 = vsel %vm739, %v2750, 0
      %v2800 = vsel %vm739, %v2751, 0
      %v2803 = vsel %vm739, %v2752, 0
      %v2806 = vsel %vm739, %v2753, 0
      %v2809 = vsel %vm739, %v2754, 0
      %v2812 = vsel %vm739, %v2755, 0
      %v2815 = vsel %vm739, %v2756, 0
      %v2818 = vsel %vm739, %v2757, 0
      %v2821 = vsel %vm739, %v2758, 0
      %v2824 = vsel %vm739, %v2759, 0
      %v2827 = vsel %vm739, %v2760, 0
      %v2830 = vsel %vm739, %v2761, 0
      %v2833 = vsel %vm739, %v2762, 0
      %v2836 = vsel %vm739, %v2763, 0
      %v2839 = vsel %vm739, %v2764, 0
      %v2842 = vsel %vm739, %v2765, 0
      %v2845 = vsel %vm739, %v2766, 0
      %v2848 = vsel %vm739, %v2767, 0
      %v2851 = vsel %vm739, %v2768, 0
      %v2854 = vsel %vm739, %v2769, 0
      %v2857 = vsel %vm739, %v2770, 0
      %v2860 = vsel %vm739, %v2771, 0
      %v2863 = vsel %vm739, %v2772, 0
      %v2866 = vsel %vm739, %v2773, 0
      %v2869 = vsel %vm739, %v2774, 0
      %v2872 = vsel %vm739, %v2775, 0
      %v2875 = vsel %vm739, %v2776, 0
      %v2878 = vsel %vm739, %v2777, 0
      %v2881 = vsel %vm739, %v2778, 0
      %v2884 = vsel %vm739, %v2779, 0
      %v2887 = vsel %vm739, %v2780, 0
      %2889 = vmatpush.msra.mxu0 0.0
      %2890 = vmatpush.msra.mxu0 0.0
      %2891 = vmatpush.msra.mxu0 0.0
      %2892 = vmatpush.msra.mxu0 0.0
      %2893 = vmatpush.msra.mxu0 0.0
      %2894 = vmatpush.msra.mxu0 0.0
      %2895 = vmatpush.msra.mxu0 0.0
      %2896 = vmatpush.msra.mxu0 0.0
      %2897 = vmatpush.msra.mxu0 %v2788
      %2898 = vmatpush.msra.mxu0 %v2787
      %2899 = vmatpush.msra.mxu0 %v2786
      %2900 = vmatpush.msra.mxu0 %v2785
      %2901 = vmatpush.msra.mxu0 %v2784
      %2902 = vmatpush.msra.mxu0 %v2783
      %2903 = vmatpush.msra.mxu0 %v2782
      %2904 = vmatpush.msra.mxu0 %v2781
      %2905 = vmatmul.f32.gmra.mxu0 %v2794
      %v2906 = vpop.f32.mrf.mxu0
      %v2907 = vadd.f32 %v2791, %v2906
      %2908 = vmatmul.f32.gmra.mxu0 %v2797
      %v2909 = vpop.f32.mrf.mxu0
      %v2910 = vadd.f32 %v2791, %v2909
      %2911 = vmatmul.f32.gmra.mxu0 %v2800
      %v2912 = vpop.f32.mrf.mxu0
      %v2913 = vadd.f32 %v2791, %v2912
      %2914 = vmatmul.f32.gmra.mxu0 %v2803
      %v2915 = vpop.f32.mrf.mxu0
      %v2916 = vadd.f32 %v2791, %v2915
      %2917 = vmatmul.f32.gmra.mxu0 %v2806
      %v2918 = vpop.f32.mrf.mxu0
      %v2919 = vadd.f32 %v2791, %v2918
      %2920 = vmatmul.f32.gmra.mxu0 %v2809
      %v2921 = vpop.f32.mrf.mxu0
      %v2922 = vadd.f32 %v2791, %v2921
      %2923 = vmatmul.f32.gmra.mxu0 %v2812
      %v2924 = vpop.f32.mrf.mxu0
      %v2925 = vadd.f32 %v2791, %v2924
      %2926 = vmatmul.f32.gmra.mxu0 %v2815
      %v2927 = vpop.f32.mrf.mxu0
      %v2928 = vadd.f32 %v2791, %v2927
      %2929 = vmatmul.f32.gmra.mxu0 %v2818
      %v2930 = vpop.f32.mrf.mxu0
      %v2931 = vadd.f32 %v2791, %v2930
      %2932 = vmatmul.f32.gmra.mxu0 %v2821
      %v2933 = vpop.f32.mrf.mxu0
      %v2934 = vadd.f32 %v2791, %v2933
      %2935 = vmatmul.f32.gmra.mxu0 %v2824
      %v2936 = vpop.f32.mrf.mxu0
      %v2937 = vadd.f32 %v2791, %v2936
      %2938 = vmatmul.f32.gmra.mxu0 %v2827
      %v2939 = vpop.f32.mrf.mxu0
      %v2940 = vadd.f32 %v2791, %v2939
      %2941 = vmatmul.f32.gmra.mxu0 %v2830
      %v2942 = vpop.f32.mrf.mxu0
      %v2943 = vadd.f32 %v2791, %v2942
      %2944 = vmatmul.f32.gmra.mxu0 %v2833
      %v2945 = vpop.f32.mrf.mxu0
      %v2946 = vadd.f32 %v2791, %v2945
      %2947 = vmatmul.f32.gmra.mxu0 %v2836
      %v2948 = vpop.f32.mrf.mxu0
      %v2949 = vadd.f32 %v2791, %v2948
      %2950 = vmatmul.f32.gmra.mxu0 %v2839
      %v2951 = vpop.f32.mrf.mxu0
      %v2952 = vadd.f32 %v2791, %v2951
      %2953 = vmatmul.f32.gmra.mxu0 %v2842
      %v2954 = vpop.f32.mrf.mxu0
      %v2955 = vadd.f32 %v2791, %v2954
      %2956 = vmatmul.f32.gmra.mxu0 %v2845
      %v2957 = vpop.f32.mrf.mxu0
      %v2958 = vadd.f32 %v2791, %v2957
      %2959 = vmatmul.f32.gmra.mxu0 %v2848
      %v2960 = vpop.f32.mrf.mxu0
      %v2961 = vadd.f32 %v2791, %v2960
      %2962 = vmatmul.f32.gmra.mxu0 %v2851
      %v2963 = vpop.f32.mrf.mxu0
      %v2964 = vadd.f32 %v2791, %v2963
      %2965 = vmatmul.f32.gmra.mxu0 %v2854
      %v2966 = vpop.f32.mrf.mxu0
      %v2967 = vadd.f32 %v2791, %v2966
      %2968 = vmatmul.f32.gmra.mxu0 %v2857
      %v2969 = vpop.f32.mrf.mxu0
      %v2970 = vadd.f32 %v2791, %v2969
      %2971 = vmatmul.f32.gmra.mxu0 %v2860
      %v2972 = vpop.f32.mrf.mxu0
      %v2973 = vadd.f32 %v2791, %v2972
      %2974 = vmatmul.f32.gmra.mxu0 %v2863
      %v2975 = vpop.f32.mrf.mxu0
      %v2976 = vadd.f32 %v2791, %v2975
      %2977 = vmatmul.f32.gmra.mxu0 %v2866
      %v2978 = vpop.f32.mrf.mxu0
      %v2979 = vadd.f32 %v2791, %v2978
      %2980 = vmatmul.f32.gmra.mxu0 %v2869
      %v2981 = vpop.f32.mrf.mxu0
      %v2982 = vadd.f32 %v2791, %v2981
      %2983 = vmatmul.f32.gmra.mxu0 %v2872
      %v2984 = vpop.f32.mrf.mxu0
      %v2985 = vadd.f32 %v2791, %v2984
      %2986 = vmatmul.f32.gmra.mxu0 %v2875
      %v2987 = vpop.f32.mrf.mxu0
      %v2988 = vadd.f32 %v2791, %v2987
      %2989 = vmatmul.f32.gmra.mxu0 %v2878
      %v2990 = vpop.f32.mrf.mxu0
      %v2991 = vadd.f32 %v2791, %v2990
      %2992 = vmatmul.f32.gmra.mxu0 %v2881
      %v2993 = vpop.f32.mrf.mxu0
      %v2994 = vadd.f32 %v2791, %v2993
      %2995 = vmatmul.f32.gmra.mxu0 %v2884
      %v2996 = vpop.f32.mrf.mxu0
      %v2997 = vadd.f32 %v2791, %v2996
      %2998 = vmatmul.f32.gmra.mxu0 %v2887
      %v2999 = vpop.f32.mrf.mxu0
      %v3000 = vadd.f32 %v2791, %v2999
      %3001 = vdwg.mxu0
      %v3002 = vtanh.pop %v2907
      %v3003 = vtanh.pop %v2910
      %v3004 = vtanh.pop %v2913
      %v3005 = vtanh.pop %v2916
      %v3006 = vtanh.pop %v2919
      %v3007 = vtanh.pop %v2922
      %v3008 = vtanh.pop %v2925
      %v3009 = vtanh.pop %v2928
      %v3010 = vtanh.pop %v2931
      %v3011 = vtanh.pop %v2934
      %v3012 = vtanh.pop %v2937
      %v3013 = vtanh.pop %v2940
      %v3014 = vtanh.pop %v2943
      %v3015 = vtanh.pop %v2946
      %v3016 = vtanh.pop %v2949
      %v3017 = vtanh.pop %v2952
      %v3018 = vtanh.pop %v2955
      %v3019 = vtanh.pop %v2958
      %v3020 = vtanh.pop %v2961
      %v3021 = vtanh.pop %v2964
      %v3022 = vtanh.pop %v2967
      %v3023 = vtanh.pop %v2970
      %v3024 = vtanh.pop %v2973
      %v3025 = vtanh.pop %v2976
      %v3026 = vtanh.pop %v2979
      %v3027 = vtanh.pop %v2982
      %v3028 = vtanh.pop %v2985
      %v3029 = vtanh.pop %v2988
      %v3030 = vtanh.pop %v2991
      %v3031 = vtanh.pop %v2994
      %v3032 = vtanh.pop %v2997
      %v3033 = vtanh.pop %v3000
      %v3034 = vld [vmem:[%s9] sm:$0xff]
      %v3035 = vld [vmem:[%s9 + $0x8] sm:$0xff]
      %v3036 = vld [vmem:[%s9 + $0x10] sm:$0xff]
      %v3037 = vld [vmem:[%s9 + $0x18] sm:$0xff]
      %v3038 = vld [vmem:[%s9 + $0x20] sm:$0xff]
      %v3039 = vld [vmem:[%s9 + $0x28] sm:$0xff]
      %v3040 = vld [vmem:[%s9 + $0x30] sm:$0xff]
      %v3041 = vld [vmem:[%s9 + $0x38] sm:$0xff]
      %v3042 = vld [vmem:[%s10] sm:$0x1]
      %v3044 = vperm.slane %v3042, 0
      %v3047 = vsel %vm739, %v3002, 0
      %v3050 = vsel %vm739, %v3003, 0
      %v3053 = vsel %vm739, %v3004, 0
      %v3056 = vsel %vm739, %v3005, 0
      %v3059 = vsel %vm739, %v3006, 0
      %v3062 = vsel %vm739, %v3007, 0
      %v3065 = vsel %vm739, %v3008, 0
      %v3068 = vsel %vm739, %v3009, 0
      %v3071 = vsel %vm739, %v3010, 0
      %v3074 = vsel %vm739, %v3011, 0
      %v3077 = vsel %vm739, %v3012, 0
      %v3080 = vsel %vm739, %v3013, 0
      %v3083 = vsel %vm739, %v3014, 0
      %v3086 = vsel %vm739, %v3015, 0
      %v3089 = vsel %vm739, %v3016, 0
      %v3092 = vsel %vm739, %v3017, 0
      %v3095 = vsel %vm739, %v3018, 0
      %v3098 = vsel %vm739, %v3019, 0
      %v3101 = vsel %vm739, %v3020, 0
      %v3104 = vsel %vm739, %v3021, 0
      %v3107 = vsel %vm739, %v3022, 0
      %v3110 = vsel %vm739, %v3023, 0
      %v3113 = vsel %vm739, %v3024, 0
      %v3116 = vsel %vm739, %v3025, 0
      %v3119 = vsel %vm739, %v3026, 0
      %v3122 = vsel %vm739, %v3027, 0
      %v3125 = vsel %vm739, %v3028, 0
      %v3128 = vsel %vm739, %v3029, 0
      %v3131 = vsel %vm739, %v3030, 0
      %v3134 = vsel %vm739, %v3031, 0
      %v3137 = vsel %vm739, %v3032, 0
      %v3140 = vsel %vm739, %v3033, 0
      %3142 = vmatpush.msra.mxu0 0.0
      %3143 = vmatpush.msra.mxu0 0.0
      %3144 = vmatpush.msra.mxu0 0.0
      %3145 = vmatpush.msra.mxu0 0.0
      %3146 = vmatpush.msra.mxu0 0.0
      %3147 = vmatpush.msra.mxu0 0.0
      %3148 = vmatpush.msra.mxu0 0.0
      %3149 = vmatpush.msra.mxu0 0.0
      %3150 = vmatpush.msra.mxu0 %v3041
      %3151 = vmatpush.msra.mxu0 %v3040
      %3152 = vmatpush.msra.mxu0 %v3039
      %3153 = vmatpush.msra.mxu0 %v3038
      %3154 = vmatpush.msra.mxu0 %v3037
      %3155 = vmatpush.msra.mxu0 %v3036
      %3156 = vmatpush.msra.mxu0 %v3035
      %3157 = vmatpush.msra.mxu0 %v3034
      %3158 = vmatmul.f32.gmra.mxu0 %v3047
      %v3159 = vpop.f32.mrf.mxu0
      %v3160 = vadd.f32 %v3044, %v3159
      %3161 = vmatmul.f32.gmra.mxu0 %v3050
      %v3162 = vpop.f32.mrf.mxu0
      %v3163 = vadd.f32 %v3044, %v3162
      %3164 = vmatmul.f32.gmra.mxu0 %v3053
      %v3165 = vpop.f32.mrf.mxu0
      %v3166 = vadd.f32 %v3044, %v3165
      %3167 = vmatmul.f32.gmra.mxu0 %v3056
      %v3168 = vpop.f32.mrf.mxu0
      %v3169 = vadd.f32 %v3044, %v3168
      %3170 = vmatmul.f32.gmra.mxu0 %v3059
      %v3171 = vpop.f32.mrf.mxu0
      %v3172 = vadd.f32 %v3044, %v3171
      %3173 = vmatmul.f32.gmra.mxu0 %v3062
      %v3174 = vpop.f32.mrf.mxu0
      %v3175 = vadd.f32 %v3044, %v3174
      %3176 = vmatmul.f32.gmra.mxu0 %v3065
      %v3177 = vpop.f32.mrf.mxu0
      %v3178 = vadd.f32 %v3044, %v3177
      %3179 = vmatmul.f32.gmra.mxu0 %v3068
      %v3180 = vpop.f32.mrf.mxu0
      %v3181 = vadd.f32 %v3044, %v3180
      %3182 = vmatmul.f32.gmra.mxu0 %v3071
      %v3183 = vpop.f32.mrf.mxu0
      %v3184 = vadd.f32 %v3044, %v3183
      %3185 = vmatmul.f32.gmra.mxu0 %v3074
      %v3186 = vpop.f32.mrf.mxu0
      %v3187 = vadd.f32 %v3044, %v3186
      %3188 = vmatmul.f32.gmra.mxu0 %v3077
      %v3189 = vpop.f32.mrf.mxu0
      %v3190 = vadd.f32 %v3044, %v3189
      %3191 = vmatmul.f32.gmra.mxu0 %v3080
      %v3192 = vpop.f32.mrf.mxu0
      %v3193 = vadd.f32 %v3044, %v3192
      %3194 = vmatmul.f32.gmra.mxu0 %v3083
      %v3195 = vpop.f32.mrf.mxu0
      %v3196 = vadd.f32 %v3044, %v3195
      %3197 = vmatmul.f32.gmra.mxu0 %v3086
      %v3198 = vpop.f32.mrf.mxu0
      %v3199 = vadd.f32 %v3044, %v3198
      %3200 = vmatmul.f32.gmra.mxu0 %v3089
      %v3201 = vpop.f32.mrf.mxu0
      %v3202 = vadd.f32 %v3044, %v3201
      %3203 = vmatmul.f32.gmra.mxu0 %v3092
      %v3204 = vpop.f32.mrf.mxu0
      %v3205 = vadd.f32 %v3044, %v3204
      %3206 = vmatmul.f32.gmra.mxu0 %v3095
      %v3207 = vpop.f32.mrf.mxu0
      %v3208 = vadd.f32 %v3044, %v3207
      %3209 = vmatmul.f32.gmra.mxu0 %v3098
      %v3210 = vpop.f32.mrf.mxu0
      %v3211 = vadd.f32 %v3044, %v3210
      %3212 = vmatmul.f32.gmra.mxu0 %v3101
      %v3213 = vpop.f32.mrf.mxu0
      %v3214 = vadd.f32 %v3044, %v3213
      %3215 = vmatmul.f32.gmra.mxu0 %v3104
      %v3216 = vpop.f32.mrf.mxu0
      %v3217 = vadd.f32 %v3044, %v3216
      %3218 = vmatmul.f32.gmra.mxu0 %v3107
      %v3219 = vpop.f32.mrf.mxu0
      %v3220 = vadd.f32 %v3044, %v3219
      %3221 = vmatmul.f32.gmra.mxu0 %v3110
      %v3222 = vpop.f32.mrf.mxu0
      %v3223 = vadd.f32 %v3044, %v3222
      %3224 = vmatmul.f32.gmra.mxu0 %v3113
      %v3225 = vpop.f32.mrf.mxu0
      %v3226 = vadd.f32 %v3044, %v3225
      %3227 = vmatmul.f32.gmra.mxu0 %v3116
      %v3228 = vpop.f32.mrf.mxu0
      %v3229 = vadd.f32 %v3044, %v3228
      %3230 = vmatmul.f32.gmra.mxu0 %v3119
      %v3231 = vpop.f32.mrf.mxu0
      %v3232 = vadd.f32 %v3044, %v3231
      %3233 = vmatmul.f32.gmra.mxu0 %v3122
      %v3234 = vpop.f32.mrf.mxu0
      %v3235 = vadd.f32 %v3044, %v3234
      %3236 = vmatmul.f32.gmra.mxu0 %v3125
      %v3237 = vpop.f32.mrf.mxu0
      %v3238 = vadd.f32 %v3044, %v3237
      %3239 = vmatmul.f32.gmra.mxu0 %v3128
      %v3240 = vpop.f32.mrf.mxu0
      %v3241 = vadd.f32 %v3044, %v3240
      %3242 = vmatmul.f32.gmra.mxu0 %v3131
      %v3243 = vpop.f32.mrf.mxu0
      %v3244 = vadd.f32 %v3044, %v3243
      %3245 = vmatmul.f32.gmra.mxu0 %v3134
      %v3246 = vpop.f32.mrf.mxu0
      %v3247 = vadd.f32 %v3044, %v3246
      %3248 = vmatmul.f32.gmra.mxu0 %v3137
      %v3249 = vpop.f32.mrf.mxu0
      %v3250 = vadd.f32 %v3044, %v3249
      %3251 = vmatmul.f32.gmra.mxu0 %v3140
      %v3252 = vpop.f32.mrf.mxu0
      %v3253 = vadd.f32 %v3044, %v3252
      %3254 = vdwg.mxu0
      %v3255 = vtanh.pop %v3160
      %v3256 = vtanh.pop %v3163
      %v3257 = vtanh.pop %v3166
      %v3258 = vtanh.pop %v3169
      %v3259 = vtanh.pop %v3172
      %v3260 = vtanh.pop %v3175
      %v3261 = vtanh.pop %v3178
      %v3262 = vtanh.pop %v3181
      %v3263 = vtanh.pop %v3184
      %v3264 = vtanh.pop %v3187
      %v3265 = vtanh.pop %v3190
      %v3266 = vtanh.pop %v3193
      %v3267 = vtanh.pop %v3196
      %v3268 = vtanh.pop %v3199
      %v3269 = vtanh.pop %v3202
      %v3270 = vtanh.pop %v3205
      %v3271 = vtanh.pop %v3208
      %v3272 = vtanh.pop %v3211
      %v3273 = vtanh.pop %v3214
      %v3274 = vtanh.pop %v3217
      %v3275 = vtanh.pop %v3220
      %v3276 = vtanh.pop %v3223
      %v3277 = vtanh.pop %v3226
      %v3278 = vtanh.pop %v3229
      %v3279 = vtanh.pop %v3232
      %v3280 = vtanh.pop %v3235
      %v3281 = vtanh.pop %v3238
      %v3282 = vtanh.pop %v3241
      %v3283 = vtanh.pop %v3244
      %v3284 = vtanh.pop %v3247
      %v3285 = vtanh.pop %v3250
      %v3286 = vtanh.pop %v3253
      %v3287 = vld [vmem:[%s11] sm:$0xff]
      %v3288 = vld [vmem:[%s11 + $0x8] sm:$0xff]
      %v3289 = vld [vmem:[%s11 + $0x10] sm:$0xff]
      %v3290 = vld [vmem:[%s11 + $0x18] sm:$0xff]
      %v3291 = vld [vmem:[%s11 + $0x20] sm:$0xff]
      %v3292 = vld [vmem:[%s11 + $0x28] sm:$0xff]
      %v3293 = vld [vmem:[%s11 + $0x30] sm:$0xff]
      %v3294 = vld [vmem:[%s11 + $0x38] sm:$0xff]
      %v3295 = vld [vmem:[%s12] sm:$0x1]
      %v3297 = vperm.slane %v3295, 0
      %v3300 = vsel %vm739, %v3255, 0
      %v3303 = vsel %vm739, %v3256, 0
      %v3306 = vsel %vm739, %v3257, 0
      %v3309 = vsel %vm739, %v3258, 0
      %v3312 = vsel %vm739, %v3259, 0
      %v3315 = vsel %vm739, %v3260, 0
      %v3318 = vsel %vm739, %v3261, 0
      %v3321 = vsel %vm739, %v3262, 0
      %v3324 = vsel %vm739, %v3263, 0
      %v3327 = vsel %vm739, %v3264, 0
      %v3330 = vsel %vm739, %v3265, 0
      %v3333 = vsel %vm739, %v3266, 0
      %v3336 = vsel %vm739, %v3267, 0
      %v3339 = vsel %vm739, %v3268, 0
      %v3342 = vsel %vm739, %v3269, 0
      %v3345 = vsel %vm739, %v3270, 0
      %v3348 = vsel %vm739, %v3271, 0
      %v3351 = vsel %vm739, %v3272, 0
      %v3354 = vsel %vm739, %v3273, 0
      %v3357 = vsel %vm739, %v3274, 0
      %v3360 = vsel %vm739, %v3275, 0
      %v3363 = vsel %vm739, %v3276, 0
      %v3366 = vsel %vm739, %v3277, 0
      %v3369 = vsel %vm739, %v3278, 0
      %v3372 = vsel %vm739, %v3279, 0
      %v3375 = vsel %vm739, %v3280, 0
      %v3378 = vsel %vm739, %v3281, 0
      %v3381 = vsel %vm739, %v3282, 0
      %v3384 = vsel %vm739, %v3283, 0
      %v3387 = vsel %vm739, %v3284, 0
      %v3390 = vsel %vm739, %v3285, 0
      %v3393 = vsel %vm739, %v3286, 0
      %3395 = vmatpush.msra.mxu0 0.0
      %3396 = vmatpush.msra.mxu0 0.0
      %3397 = vmatpush.msra.mxu0 0.0
      %3398 = vmatpush.msra.mxu0 0.0
      %3399 = vmatpush.msra.mxu0 0.0
      %3400 = vmatpush.msra.mxu0 0.0
      %3401 = vmatpush.msra.mxu0 0.0
      %3402 = vmatpush.msra.mxu0 0.0
      %3403 = vmatpush.msra.mxu0 %v3294
      %3404 = vmatpush.msra.mxu0 %v3293
      %3405 = vmatpush.msra.mxu0 %v3292
      %3406 = vmatpush.msra.mxu0 %v3291
      %3407 = vmatpush.msra.mxu0 %v3290
      %3408 = vmatpush.msra.mxu0 %v3289
      %3409 = vmatpush.msra.mxu0 %v3288
      %3410 = vmatpush.msra.mxu0 %v3287
      %3411 = vmatmul.f32.gmra.mxu0 %v3300
      %v3412 = vpop.f32.mrf.mxu0
      %v3413 = vadd.f32 %v3297, %v3412
      %3414 = vmatmul.f32.gmra.mxu0 %v3303
      %v3415 = vpop.f32.mrf.mxu0
      %v3416 = vadd.f32 %v3297, %v3415
      %3417 = vmatmul.f32.gmra.mxu0 %v3306
      %v3418 = vpop.f32.mrf.mxu0
      %v3419 = vadd.f32 %v3297, %v3418
      %3420 = vmatmul.f32.gmra.mxu0 %v3309
      %v3421 = vpop.f32.mrf.mxu0
      %v3422 = vadd.f32 %v3297, %v3421
      %3423 = vmatmul.f32.gmra.mxu0 %v3312
      %v3424 = vpop.f32.mrf.mxu0
      %v3425 = vadd.f32 %v3297, %v3424
      %3426 = vmatmul.f32.gmra.mxu0 %v3315
      %v3427 = vpop.f32.mrf.mxu0
      %v3428 = vadd.f32 %v3297, %v3427
      %3429 = vmatmul.f32.gmra.mxu0 %v3318
      %v3430 = vpop.f32.mrf.mxu0
      %v3431 = vadd.f32 %v3297, %v3430
      %3432 = vmatmul.f32.gmra.mxu0 %v3321
      %v3433 = vpop.f32.mrf.mxu0
      %v3434 = vadd.f32 %v3297, %v3433
      %3435 = vmatmul.f32.gmra.mxu0 %v3324
      %v3436 = vpop.f32.mrf.mxu0
      %v3437 = vadd.f32 %v3297, %v3436
      %3438 = vmatmul.f32.gmra.mxu0 %v3327
      %v3439 = vpop.f32.mrf.mxu0
      %v3440 = vadd.f32 %v3297, %v3439
      %3441 = vmatmul.f32.gmra.mxu0 %v3330
      %v3442 = vpop.f32.mrf.mxu0
      %v3443 = vadd.f32 %v3297, %v3442
      %3444 = vmatmul.f32.gmra.mxu0 %v3333
      %v3445 = vpop.f32.mrf.mxu0
      %v3446 = vadd.f32 %v3297, %v3445
      %3447 = vmatmul.f32.gmra.mxu0 %v3336
      %v3448 = vpop.f32.mrf.mxu0
      %v3449 = vadd.f32 %v3297, %v3448
      %3450 = vmatmul.f32.gmra.mxu0 %v3339
      %v3451 = vpop.f32.mrf.mxu0
      %v3452 = vadd.f32 %v3297, %v3451
      %3453 = vmatmul.f32.gmra.mxu0 %v3342
      %v3454 = vpop.f32.mrf.mxu0
      %v3455 = vadd.f32 %v3297, %v3454
      %3456 = vmatmul.f32.gmra.mxu0 %v3345
      %v3457 = vpop.f32.mrf.mxu0
      %v3458 = vadd.f32 %v3297, %v3457
      %3459 = vmatmul.f32.gmra.mxu0 %v3348
      %v3460 = vpop.f32.mrf.mxu0
      %v3461 = vadd.f32 %v3297, %v3460
      %3462 = vmatmul.f32.gmra.mxu0 %v3351
      %v3463 = vpop.f32.mrf.mxu0
      %v3464 = vadd.f32 %v3297, %v3463
      %3465 = vmatmul.f32.gmra.mxu0 %v3354
      %v3466 = vpop.f32.mrf.mxu0
      %v3467 = vadd.f32 %v3297, %v3466
      %3468 = vmatmul.f32.gmra.mxu0 %v3357
      %v3469 = vpop.f32.mrf.mxu0
      %v3470 = vadd.f32 %v3297, %v3469
      %3471 = vmatmul.f32.gmra.mxu0 %v3360
      %v3472 = vpop.f32.mrf.mxu0
      %v3473 = vadd.f32 %v3297, %v3472
      %3474 = vmatmul.f32.gmra.mxu0 %v3363
      %v3475 = vpop.f32.mrf.mxu0
      %v3476 = vadd.f32 %v3297, %v3475
      %3477 = vmatmul.f32.gmra.mxu0 %v3366
      %v3478 = vpop.f32.mrf.mxu0
      %v3479 = vadd.f32 %v3297, %v3478
      %3480 = vmatmul.f32.gmra.mxu0 %v3369
      %v3481 = vpop.f32.mrf.mxu0
      %v3482 = vadd.f32 %v3297, %v3481
      %3483 = vmatmul.f32.gmra.mxu0 %v3372
      %v3484 = vpop.f32.mrf.mxu0
      %v3485 = vadd.f32 %v3297, %v3484
      %3486 = vmatmul.f32.gmra.mxu0 %v3375
      %v3487 = vpop.f32.mrf.mxu0
      %v3488 = vadd.f32 %v3297, %v3487
      %3489 = vmatmul.f32.gmra.mxu0 %v3378
      %v3490 = vpop.f32.mrf.mxu0
      %v3491 = vadd.f32 %v3297, %v3490
      %3492 = vmatmul.f32.gmra.mxu0 %v3381
      %v3493 = vpop.f32.mrf.mxu0
      %v3494 = vadd.f32 %v3297, %v3493
      %3495 = vmatmul.f32.gmra.mxu0 %v3384
      %v3496 = vpop.f32.mrf.mxu0
      %v3497 = vadd.f32 %v3297, %v3496
      %3498 = vmatmul.f32.gmra.mxu0 %v3387
      %v3499 = vpop.f32.mrf.mxu0
      %v3500 = vadd.f32 %v3297, %v3499
      %3501 = vmatmul.f32.gmra.mxu0 %v3390
      %v3502 = vpop.f32.mrf.mxu0
      %v3503 = vadd.f32 %v3297, %v3502
      %3504 = vmatmul.f32.gmra.mxu0 %v3393
      %v3505 = vpop.f32.mrf.mxu0
      %v3506 = vadd.f32 %v3297, %v3505
      %3507 = vdwg.mxu0
      %s3508 = scalar_lea.vmem %s442, 256
      %3509 = vst [vmem:[%s3508] sm:$0xff] %v3413
      %3510 = vst [vmem:[%s3508 + $0x8] sm:$0xff] %v3416
      %3511 = vst [vmem:[%s3508 + $0x10] sm:$0xff] %v3419
      %3512 = vst [vmem:[%s3508 + $0x18] sm:$0xff] %v3422
      %3513 = vst [vmem:[%s3508 + $0x20] sm:$0xff] %v3425
      %3514 = vst [vmem:[%s3508 + $0x28] sm:$0xff] %v3428
      %3515 = vst [vmem:[%s3508 + $0x30] sm:$0xff] %v3431
      %3516 = vst [vmem:[%s3508 + $0x38] sm:$0xff] %v3434
      %3517 = vst [vmem:[%s3508 + $0x40] sm:$0xff] %v3437
      %3518 = vst [vmem:[%s3508 + $0x48] sm:$0xff] %v3440
      %3519 = vst [vmem:[%s3508 + $0x50] sm:$0xff] %v3443
      %3520 = vst [vmem:[%s3508 + $0x58] sm:$0xff] %v3446
      %3521 = vst [vmem:[%s3508 + $0x60] sm:$0xff] %v3449
      %3522 = vst [vmem:[%s3508 + $0x68] sm:$0xff] %v3452
      %3523 = vst [vmem:[%s3508 + $0x70] sm:$0xff] %v3455
      %3524 = vst [vmem:[%s3508 + $0x78] sm:$0xff] %v3458
      %3525 = vst [vmem:[%s3508 + $0x80] sm:$0xff] %v3461
      %3526 = vst [vmem:[%s3508 + $0x88] sm:$0xff] %v3464
      %3527 = vst [vmem:[%s3508 + $0x90] sm:$0xff] %v3467
      %3528 = vst [vmem:[%s3508 + $0x98] sm:$0xff] %v3470
      %3529 = vst [vmem:[%s3508 + $0xa0] sm:$0xff] %v3473
      %3530 = vst [vmem:[%s3508 + $0xa8] sm:$0xff] %v3476
      %3531 = vst [vmem:[%s3508 + $0xb0] sm:$0xff] %v3479
      %3532 = vst [vmem:[%s3508 + $0xb8] sm:$0xff] %v3482
      %3533 = vst [vmem:[%s3508 + $0xc0] sm:$0xff] %v3485
      %3534 = vst [vmem:[%s3508 + $0xc8] sm:$0xff] %v3488
      %3535 = vst [vmem:[%s3508 + $0xd0] sm:$0xff] %v3491
      %3536 = vst [vmem:[%s3508 + $0xd8] sm:$0xff] %v3494
      %3537 = vst [vmem:[%s3508 + $0xe0] sm:$0xff] %v3497
      %3538 = vst [vmem:[%s3508 + $0xe8] sm:$0xff] %v3500
      %3539 = vst [vmem:[%s3508 + $0xf0] sm:$0xff] %v3503
      %3540 = vst [vmem:[%s3508 + $0xf8] sm:$0xff] %v3506
      %s3541 = smul.u32 64, %s24
      %p3542 = scmp.lt.s32.totalorder %s3541, 127
      %s3543 = scalar_select %p3542, %s3541, 127
      %s3544 = smul.addr %s3543, 8
      %s3545 = scalar_lea.vmem %s13, %s3544
      // Predicated region
      $region73: #{neural_net_forward.1} parent=71 // pred_check
        %p3546 = pneg %p320
      $region74: #{neural_net_forward.1} parent=71 // pred_check_branch
        %3548 = sbr.rel (%p3546) target = $region76
      $region75: #{neural_net_forward.1} parent=71 // pred_region
        %s3549 = smul.u32 64, %s24
      $region76: #{neural_net_forward.1} parent=71 // pred_fallthru
        _
    $region72: #{neural_net_forward.1} parent=5 // pred_fallthru
      _
    %p3550 = scmp.le.s32.totalorder 2, %s19
    // Predicated region
    $region77: #{neural_net_forward.1} parent=5 // pred_check
      %p3551 = pneg %p3550
    $region78: #{neural_net_forward.1} parent=5 // pred_check_branch
      %3553 = sbr.rel (%p3551) target = $region80
    $region79: #{neural_net_forward.1} parent=5 // pred_region
      %s3554 = ssub.s32 %s19, 2
      // Predicated region
      $region81: #{neural_net_forward.1} parent=79 // pred_check
        %p3555 = pneg %p326
      $region82: #{neural_net_forward.1} parent=79 // pred_check_branch
        %3557 = sbr.rel (%p3555) target = $region84
      $region83: #{neural_net_forward.1} parent=79 // pred_region
        %s3558 = smul.u32 64, %s25
        %p3559 = scmp.lt.s32.totalorder %s3558, 127
        %s3560 = scalar_select %p3559, %s3558, 127
        %s3561 = smul.addr %s3560, 8
        %s3562 = scalar_lea.vmem %s13, %s3561
      $region84: #{neural_net_forward.1} parent=79 // pred_fallthru
        _
    $region80: #{neural_net_forward.1} parent=5 // pred_fallthru
      _
  $region6: #{neural_net_forward.1} parent=0 // loop_footer
    %s23 = sadd.s32 1, %s19
  $region7: #{neural_net_forward.1} parent=0 // loop_footer_branch
    %18 = sbr.rel target = $region3
  $region8: #{neural_net_forward.1} parent=0 // loop_exit
    _

</llo_original>
